<compile_context>
chip_gen: v7x
topology: tpu7x:2x2x1
jax: 0.10.0
libtpu: 0.0.40
codegen_flags: <defaults>
</compile_context>

<pallas_src>
import functools

import jax
import jax.numpy as jnp
from jax import lax
from jax.experimental import pallas as pl
from jax.experimental.pallas import tpu as pltpu


def _round_up(x, m):
    return ((x + m - 1) // m) * m


def _gru_kernel(x_ref, wih_hbm, whh_hbm, bcomb_ref, bhn_ref, h_ref,
                wih_vmem, whh_vmem, dma_sem, *, seq_len, t_block, padded_len):
    """One grid step = `t_block` GRU time steps (PyTorch gate order r, z, n)."""
    tb = pl.program_id(1)
    hp = h_ref.shape[-1]

    @pl.when(tb == 0)
    def _():
        # Loop-invariant weights: single VMEM copy (no double buffering).
        cp_ih = pltpu.make_async_copy(wih_hbm, wih_vmem, dma_sem.at[0])
        cp_hh = pltpu.make_async_copy(whh_hbm, whh_vmem, dma_sem.at[1])
        cp_ih.start()
        cp_hh.start()
        cp_ih.wait()
        cp_hh.wait()
        h_ref[...] = jnp.zeros_like(h_ref)

    # Hoisted out of the unrolled time loop.
    w_ih = wih_vmem[...]              # (Hp, 3*Hp) bf16
    w_hh = whh_vmem[...]              # (Hp, 3*Hp) bf16
    b_comb = bcomb_ref[...]           # (1, 3*Hp) f32: b_ih+b_hh for r/z, b_in for n
    b_hn = bhn_ref[...]               # (1, Hp)   f32

    def step(i, h):
        x = x_ref[i]                                          # (Bblk, Hp) bf16
        gi = jnp.dot(x, w_ih, preferred_element_type=jnp.float32) + b_comb
        gh = jnp.dot(h.astype(jnp.bfloat16), w_hh,
                     preferred_element_type=jnp.float32)
        # Gate split at multiples of Hp (multiple of 128) -> lane aligned.
        r = jax.nn.sigmoid(gi[:, 0:hp] + gh[:, 0:hp])
        z = jax.nn.sigmoid(gi[:, hp:2 * hp] + gh[:, hp:2 * hp])
        n = jnp.tanh(gi[:, 2 * hp:3 * hp] + r * (gh[:, 2 * hp:3 * hp] + b_hn))
        h_new = (1.0 - z) * n + z * h
        if padded_len != seq_len:
            # Ragged tail: steps past the true sequence length keep h unchanged.
            valid = (tb * t_block + i) < seq_len
            h_new = jnp.where(valid, h_new, h)
        return h_new

    h_ref[...] = lax.fori_loop(0, t_block, step, h_ref[...], unroll=True)


def gru_final_hidden(x_tbh, w_ih_t, w_hh_t, b_comb, b_hn, *,
                     seq_len, t_block, b_block):
    """x_tbh: (Tpad, Bp, Hp) bf16; weights (Hp, 3Hp) bf16; biases f32.

    Returns the final hidden state, shape (Bp, Hp) float32."""
    t_pad, b_pad, hp = x_tbh.shape
    grid = (b_pad // b_block, t_pad // t_block)
    kernel = functools.partial(_gru_kernel, seq_len=seq_len,
                               t_block=t_block, padded_len=t_pad)
    return pl.pallas_call(
        kernel,
        out_shape=jax.ShapeDtypeStruct((b_pad, hp), jnp.float32),
        grid_spec=pltpu.PrefetchScalarGridSpec(
            num_scalar_prefetch=0,
            grid=grid,
            in_specs=[
                pl.BlockSpec((t_block, b_block, hp), lambda b, t: (t, b, 0)),  # x
                pl.BlockSpec(memory_space=pl.ANY),     # W_ih^T stays in HBM
                pl.BlockSpec(memory_space=pl.ANY),     # W_hh^T stays in HBM
                pl.BlockSpec((1, 3 * hp), lambda b, t: (0, 0)),   # folded bias
                pl.BlockSpec((1, hp), lambda b, t: (0, 0)),       # b_hn
            ],
            out_specs=pl.BlockSpec((b_block, hp), lambda b, t: (b, 0)),
            scratch_shapes=[
                pltpu.VMEM((hp, 3 * hp), jnp.bfloat16),    # W_ih^T (single copy)
                pltpu.VMEM((hp, 3 * hp), jnp.bfloat16),    # W_hh^T (single copy)
                pltpu.SemaphoreType.DMA((2,)),
            ],
        ),
        compiler_params=pltpu.CompilerParams(
            dimension_semantics=("parallel", "arbitrary")),  # recurrence over T last
    )(x_tbh, w_ih_t, w_hh_t, b_comb, b_hn)


class QuestionModulePallas:
    """JAX/Pallas equivalent of the PyTorch QuestionModule (embedding + GRU)."""

    def __init__(self, vocab_size, hidden_size, key):
        self.hidden_size = hidden_size
        self.hp = _round_up(hidden_size, 128)          # lane-aligned hidden size
        k_emb, k_wih, k_whh, k_bih, k_bhh = jax.random.split(key, 5)

        # Word embedding (DMNPlus: uniform(-sqrt(3), sqrt(3)), padding_idx=0).
        emb = jax.random.uniform(k_emb, (vocab_size, hidden_size), jnp.float32,
                                 -3.0 ** 0.5, 3.0 ** 0.5)
        self.embedding = emb.at[0].set(0.0)

        # GRU parameters in PyTorch layout: (3H, H) weights, (3H,) biases.
        bound = 1.0 / float(hidden_size) ** 0.5
        self.w_ih = jax.random.uniform(k_wih, (3 * hidden_size, hidden_size),
                                       jnp.float32, -bound, bound)
        self.w_hh = jax.random.uniform(k_whh, (3 * hidden_size, hidden_size),
                                       jnp.float32, -bound, bound)
        self.b_ih = jax.random.uniform(k_bih, (3 * hidden_size,), jnp.float32,
                                       -bound, bound)
        self.b_hh = jax.random.uniform(k_bhh, (3 * hidden_size,), jnp.float32,
                                       -bound, bound)

        # Kernel-side params: transposed, per-gate lane-padded, bf16 weights.
        h, hp = hidden_size, self.hp

        def pack_w(w):
            out = jnp.zeros((hp, 3 * hp), jnp.float32)
            for g in range(3):
                out = out.at[:h, g * hp:g * hp + h].set(w[g * h:(g + 1) * h, :].T)
            return out.astype(jnp.bfloat16)

        def pack_b(b):
            out = jnp.zeros((1, 3 * hp), jnp.float32)
            for g in range(3):
                out = out.at[0, g * hp:g * hp + h].set(b[g * h:(g + 1) * h])
            return out

        self.w_ih_p = pack_w(self.w_ih)
        self.w_hh_p = pack_w(self.w_hh)
        b_ih_p = pack_b(self.b_ih)
        b_hh_p = pack_b(self.b_hh)
        # Fold biases: r/z gates get b_ih + b_hh; n gate keeps only b_in
        # (b_hn is applied inside r * (W_hn h + b_hn)).
        self.b_comb = b_ih_p + b_hh_p.at[:, 2 * hp:].set(0.0)
        self.b_hn = b_hh_p[:, 2 * hp:]
        # Embedding table padded to Hp and cast to bf16 for the kernel input path.
        self.emb_pad = jnp.zeros((vocab_size, hp), jnp.bfloat16).at[
            :, :h].set(self.embedding.astype(jnp.bfloat16))

    def __call__(self, questions, *, t_block=8):
        # questions: (B, T) int32 token ids.
        b, t = questions.shape
        bp = _round_up(b, 8)
        tc = min(t, t_block)
        t_pad = _round_up(t, tc)
        # Split the batch across TensorCores (v7x) once it is big enough.
        b_block = bp // 2 if (bp >= 16 and bp % 16 == 0) else bp

        # Time-major padded ids: only the small int32 matrix is transposed; the
        # (Tpad, Bp, Hp) activation tensor is produced directly by the gather.
        ids = jnp.zeros((t_pad, bp), jnp.int32).at[:t, :b].set(questions.T)
        x = jnp.take(self.emb_pad, ids, axis=0)            # (Tpad, Bp, Hp) bf16

        h = gru_final_hidden(x, self.w_ih_p, self.w_hh_p, self.b_comb, self.b_hn,
                             seq_len=t, t_block=tc, b_block=b_block)
        # PyTorch: hidden (1, B, H) -> transpose(0, 1) -> (B, 1, H)
        return h[:b, None, :self.hidden_size]


def _gru_reference(questions, embedding, w_ih, w_hh, b_ih, b_hh):
    """Pure-JAX reference (same bf16-weight / f32-accumulation quantization)."""
    b, t = questions.shape
    hd = embedding.shape[1]
    x = jnp.take(embedding, questions, axis=0).astype(jnp.bfloat16)   # (B, T, H)
    wih = w_ih.T.astype(jnp.bfloat16)
    whh = w_hh.T.astype(jnp.bfloat16)
    h = jnp.zeros((b, hd), jnp.float32)
    for s in range(t):
        gi = jnp.dot(x[:, s], wih, preferred_element_type=jnp.float32) + b_ih
        gh = jnp.dot(h.astype(jnp.bfloat16), whh,
                     preferred_element_type=jnp.float32) + b_hh
        r = jax.nn.sigmoid(gi[:, :hd] + gh[:, :hd])
        z = jax.nn.sigmoid(gi[:, hd:2 * hd] + gh[:, hd:2 * hd])
        n = jnp.tanh(gi[:, 2 * hd:] + r * gh[:, 2 * hd:])
        h = (1.0 - z) * n + z * h
    return h


if __name__ == "__main__":
    key = jax.random.PRNGKey(0)
    k_params, k_tok1, k_tok2 = jax.random.split(key, 3)

    vocab_size, hidden_size = 50, 32
    module = QuestionModulePallas(vocab_size, hidden_size, k_params)

    # Case 1: (batch=2, tokens=8) -- single time block.
    q1 = jax.random.randint(k_tok1, (2, 8), 1, vocab_size, dtype=jnp.int32)
    out1 = jax.block_until_ready(module(q1))
    assert out1.shape == (2, 1, hidden_size), out1.shape
    ref1 = _gru_reference(q1, module.embedding, module.w_ih, module.w_hh,
                          module.b_ih, module.b_hh)
    assert jnp.allclose(out1[:, 0, :], ref1, atol=1e-4, rtol=1e-4), (
        float(jnp.max(jnp.abs(out1[:, 0, :] - ref1))))

    # Case 2: ragged (batch=3, tokens=11) -- exercises batch/lane padding and the
    # multi-block recurrence with a masked time tail.
    q2 = jax.random.randint(k_tok2, (3, 11), 1, vocab_size, dtype=jnp.int32)
    out2 = jax.block_until_ready(module(q2))
    assert out2.shape == (3, 1, hidden_size), out2.shape
    ref2 = _gru_reference(q2, module.embedding, module.w_ih, module.w_hh,
                          module.b_ih, module.b_hh)
    assert jnp.allclose(out2[:, 0, :], ref2, atol=1e-4, rtol=1e-4), (
        float(jnp.max(jnp.abs(out2[:, 0, :] - ref2))))

    print("KERNEL_OK")
</pallas_src>

<mosaic_0001>
module attributes {stable_mosaic.version = 11 : i64} {
  func.func @_gru_kernel(%arg0: i32, %arg1: i32, %arg2: memref<8x8x128xbf16, #tpu.memory_space<vmem>>, %arg3: memref<128x384xbf16, #tpu.memory_space<any>>, %arg4: memref<128x384xbf16, #tpu.memory_space<any>>, %arg5: memref<1x384xf32, #tpu.memory_space<vmem>>, %arg6: memref<1x128xf32, #tpu.memory_space<vmem>>, %arg7: memref<8x128xf32, #tpu.memory_space<vmem>>, %arg8: memref<128x384xbf16, #tpu.memory_space<vmem>>, %arg9: memref<128x384xbf16, #tpu.memory_space<vmem>>, %arg10: memref<2x!tpu.dma_semaphore, #tpu.memory_space<semaphore_mem>>) attributes {dimension_semantics = [#tpu.dimension_semantics<parallel>, #tpu.dimension_semantics<arbitrary>], iteration_bounds = array<i64: 1, 1>, scalar_prefetch = 0 : i64, scratch_operands = 3 : i64, tpu.core_type = #tpu.core_type<tc>, window_params = [{transform_indices = @transform_0, window_bounds = array<i64: 8, 8, 128>}, {}, {}, {pipeline_mode = #tpu.pipeline_mode<synchronous>, transform_indices = @transform_3, window_bounds = array<i64: 1, 384>}, {pipeline_mode = #tpu.pipeline_mode<synchronous>, transform_indices = @transform_4, window_bounds = array<i64: 1, 128>}, {transform_indices = @transform_5, window_bounds = array<i64: 8, 128>}]} {
    %c0_i32 = arith.constant 0 : i32
    %0 = arith.cmpi eq, %arg1, %c0_i32 : i32
    %1 = arith.extui %0 : i1 to i32
    %c0_i32_0 = arith.constant 0 : i32
    %2 = arith.cmpi ne, %1, %c0_i32_0 : i32
    scf.if %2 {
      %c0_i32_68 = arith.constant 0 : i32
      %297 = tpu.memref_slice %arg10[%c0_i32_68] : memref<2x!tpu.dma_semaphore, #tpu.memory_space<semaphore_mem>> -> memref<1x!tpu.dma_semaphore, #tpu.memory_space<semaphore_mem>>
      %298 = tpu.memref_squeeze %297 : memref<1x!tpu.dma_semaphore, #tpu.memory_space<semaphore_mem>> -> memref<!tpu.dma_semaphore, #tpu.memory_space<semaphore_mem>>
      tpu.enqueue_dma source(%arg3 : memref<128x384xbf16, #tpu.memory_space<any>>) target(%arg8 : memref<128x384xbf16, #tpu.memory_space<vmem>>) target_semaphore(%298 : memref<!tpu.dma_semaphore, #tpu.memory_space<semaphore_mem>>)
      %c1_i32_69 = arith.constant 1 : i32
      %299 = tpu.memref_slice %arg10[%c1_i32_69] : memref<2x!tpu.dma_semaphore, #tpu.memory_space<semaphore_mem>> -> memref<1x!tpu.dma_semaphore, #tpu.memory_space<semaphore_mem>>
      %300 = tpu.memref_squeeze %299 : memref<1x!tpu.dma_semaphore, #tpu.memory_space<semaphore_mem>> -> memref<!tpu.dma_semaphore, #tpu.memory_space<semaphore_mem>>
      tpu.enqueue_dma source(%arg4 : memref<128x384xbf16, #tpu.memory_space<any>>) target(%arg9 : memref<128x384xbf16, #tpu.memory_space<vmem>>) target_semaphore(%300 : memref<!tpu.dma_semaphore, #tpu.memory_space<semaphore_mem>>)
      %c0_i32_70 = arith.constant 0 : i32
      %301 = tpu.memref_slice %arg10[%c0_i32_70] : memref<2x!tpu.dma_semaphore, #tpu.memory_space<semaphore_mem>> -> memref<1x!tpu.dma_semaphore, #tpu.memory_space<semaphore_mem>>
      %302 = tpu.memref_squeeze %301 : memref<1x!tpu.dma_semaphore, #tpu.memory_space<semaphore_mem>> -> memref<!tpu.dma_semaphore, #tpu.memory_space<semaphore_mem>>
      tpu.wait_dma2 semaphore(%302 : memref<!tpu.dma_semaphore, #tpu.memory_space<semaphore_mem>>) src(%arg3 : memref<128x384xbf16, #tpu.memory_space<any>>) dst(%arg8 : memref<128x384xbf16, #tpu.memory_space<vmem>>)
      %c1_i32_71 = arith.constant 1 : i32
      %303 = tpu.memref_slice %arg10[%c1_i32_71] : memref<2x!tpu.dma_semaphore, #tpu.memory_space<semaphore_mem>> -> memref<1x!tpu.dma_semaphore, #tpu.memory_space<semaphore_mem>>
      %304 = tpu.memref_squeeze %303 : memref<1x!tpu.dma_semaphore, #tpu.memory_space<semaphore_mem>> -> memref<!tpu.dma_semaphore, #tpu.memory_space<semaphore_mem>>
      tpu.wait_dma2 semaphore(%304 : memref<!tpu.dma_semaphore, #tpu.memory_space<semaphore_mem>>) src(%arg4 : memref<128x384xbf16, #tpu.memory_space<any>>) dst(%arg9 : memref<128x384xbf16, #tpu.memory_space<vmem>>)
      %cst_72 = arith.constant 0.000000e+00 : f32
      %305 = vector.broadcast %cst_72 : f32 to vector<8x128xf32>
      %c0_73 = arith.constant 0 : index
      %c0_74 = arith.constant 0 : index
      %306 = vector.load %arg7[%c0_73, %c0_74] : memref<8x128xf32, #tpu.memory_space<vmem>>, vector<8x128xf32>
      tpu.vector_store %arg7[%c0_73, %c0_74], %305 {strides = array<i32>} : memref<8x128xf32, #tpu.memory_space<vmem>>, vector<8x128xf32>,
    } else {
    }
    %c0 = arith.constant 0 : index
    %c0_1 = arith.constant 0 : index
    %3 = vector.load %arg8[%c0, %c0_1] : memref<128x384xbf16, #tpu.memory_space<vmem>>, vector<128x384xbf16>
    %c0_2 = arith.constant 0 : index
    %c0_3 = arith.constant 0 : index
    %4 = vector.load %arg9[%c0_2, %c0_3] : memref<128x384xbf16, #tpu.memory_space<vmem>>, vector<128x384xbf16>
    %c0_4 = arith.constant 0 : index
    %c0_5 = arith.constant 0 : index
    %5 = vector.load %arg5[%c0_4, %c0_5] : memref<1x384xf32, #tpu.memory_space<vmem>>, vector<1x384xf32>
    %c0_6 = arith.constant 0 : index
    %c0_7 = arith.constant 0 : index
    %6 = vector.load %arg6[%c0_6, %c0_7] : memref<1x128xf32, #tpu.memory_space<vmem>>, vector<1x128xf32>
    %c0_8 = arith.constant 0 : index
    %c0_9 = arith.constant 0 : index
    %7 = vector.load %arg7[%c0_8, %c0_9] : memref<8x128xf32, #tpu.memory_space<vmem>>, vector<8x128xf32>
    %c0_i32_10 = arith.constant 0 : i32
    %8 = arith.index_cast %c0_i32_10 : i32 to index
    %c0_11 = arith.constant 0 : index
    %c0_12 = arith.constant 0 : index
    %9 = vector.load %arg2[%8, %c0_11, %c0_12] : memref<8x8x128xbf16, #tpu.memory_space<vmem>>, vector<1x8x128xbf16>
    %10 = vector.shape_cast %9 : vector<1x8x128xbf16> to vector<8x128xbf16>
    %cst = arith.constant dense<0.000000e+00> : vector<8x384xf32>
    %11 = tpu.matmul %10, %3, %cst {dimension_numbers = #tpu.dot_dimension_numbers<[1], [0], [0], [1], [0, 0, 1, 1], [], []>} : vector<8x128xbf16>, vector<128x384xbf16>, vector<8x384xf32> -> vector<8x384xf32>
    %12 = vector.broadcast %5 : vector<1x384xf32> to vector<8x384xf32>
    %13 = arith.addf %11, %12 : vector<8x384xf32>
    %14 = arith.truncf %7 : vector<8x128xf32> to vector<8x128xbf16>
    %cst_13 = arith.constant dense<0.000000e+00> : vector<8x384xf32>
    %15 = tpu.matmul %14, %4, %cst_13 {dimension_numbers = #tpu.dot_dimension_numbers<[1], [0], [0], [1], [0, 0, 1, 1], [], []>} : vector<8x128xbf16>, vector<128x384xbf16>, vector<8x384xf32> -> vector<8x384xf32>
    %16 = vector.extract_strided_slice %13 {offsets = [0, 0], sizes = [8, 128], strides = [1, 1]} : vector<8x384xf32> to vector<8x128xf32>
    %17 = vector.extract_strided_slice %15 {offsets = [0, 0], sizes = [8, 128], strides = [1, 1]} : vector<8x384xf32> to vector<8x128xf32>
    %18 = arith.addf %16, %17 : vector<8x128xf32>
    %19 = arith.negf %18 : vector<8x128xf32>
    %20 = math.exp %19 : vector<8x128xf32>
    %cst_14 = arith.constant 1.000000e+00 : f32
    %21 = vector.broadcast %cst_14 : f32 to vector<8x128xf32>
    %22 = arith.addf %21, %20 : vector<8x128xf32>
    %23 = arith.divf %21, %22 : vector<8x128xf32>
    %24 = vector.extract_strided_slice %13 {offsets = [0, 128], sizes = [8, 128], strides = [1, 1]} : vector<8x384xf32> to vector<8x128xf32>
    %25 = vector.extract_strided_slice %15 {offsets = [0, 128], sizes = [8, 128], strides = [1, 1]} : vector<8x384xf32> to vector<8x128xf32>
    %26 = arith.addf %24, %25 : vector<8x128xf32>
    %27 = arith.negf %26 : vector<8x128xf32>
    %28 = math.exp %27 : vector<8x128xf32>
    %cst_15 = arith.constant 1.000000e+00 : f32
    %29 = vector.broadcast %cst_15 : f32 to vector<8x128xf32>
    %30 = arith.addf %29, %28 : vector<8x128xf32>
    %31 = arith.divf %29, %30 : vector<8x128xf32>
    %32 = vector.extract_strided_slice %13 {offsets = [0, 256], sizes = [8, 128], strides = [1, 1]} : vector<8x384xf32> to vector<8x128xf32>
    %33 = vector.extract_strided_slice %15 {offsets = [0, 256], sizes = [8, 128], strides = [1, 1]} : vector<8x384xf32> to vector<8x128xf32>
    %34 = vector.broadcast %6 : vector<1x128xf32> to vector<8x128xf32>
    %35 = arith.addf %33, %34 : vector<8x128xf32>
    %36 = arith.mulf %23, %35 : vector<8x128xf32>
    %37 = arith.addf %32, %36 : vector<8x128xf32>
    %38 = math.tanh %37 : vector<8x128xf32>
    %cst_16 = arith.constant 1.000000e+00 : f32
    %39 = vector.broadcast %cst_16 : f32 to vector<8x128xf32>
    %40 = arith.subf %39, %31 : vector<8x128xf32>
    %41 = arith.mulf %40, %38 : vector<8x128xf32>
    %42 = arith.mulf %31, %7 : vector<8x128xf32>
    %43 = arith.addf %41, %42 : vector<8x128xf32>
    %c1_i32 = arith.constant 1 : i32
    %44 = arith.index_cast %c1_i32 : i32 to index
    %c0_17 = arith.constant 0 : index
    %c0_18 = arith.constant 0 : index
    %45 = vector.load %arg2[%44, %c0_17, %c0_18] : memref<8x8x128xbf16, #tpu.memory_space<vmem>>, vector<1x8x128xbf16>
    %46 = vector.shape_cast %45 : vector<1x8x128xbf16> to vector<8x128xbf16>
    %cst_19 = arith.constant dense<0.000000e+00> : vector<8x384xf32>
    %47 = tpu.matmul %46, %3, %cst_19 {dimension_numbers = #tpu.dot_dimension_numbers<[1], [0], [0], [1], [0, 0, 1, 1], [], []>} : vector<8x128xbf16>, vector<128x384xbf16>, vector<8x384xf32> -> vector<8x384xf32>
    %48 = vector.broadcast %5 : vector<1x384xf32> to vector<8x384xf32>
    %49 = arith.addf %47, %48 : vector<8x384xf32>
    %50 = arith.truncf %43 : vector<8x128xf32> to vector<8x128xbf16>
    %cst_20 = arith.constant dense<0.000000e+00> : vector<8x384xf32>
    %51 = tpu.matmul %50, %4, %cst_20 {dimension_numbers = #tpu.dot_dimension_numbers<[1], [0], [0], [1], [0, 0, 1, 1], [], []>} : vector<8x128xbf16>, vector<128x384xbf16>, vector<8x384xf32> -> vector<8x384xf32>
    %52 = vector.extract_strided_slice %49 {offsets = [0, 0], sizes = [8, 128], strides = [1, 1]} : vector<8x384xf32> to vector<8x128xf32>
    %53 = vector.extract_strided_slice %51 {offsets = [0, 0], sizes = [8, 128], strides = [1, 1]} : vector<8x384xf32> to vector<8x128xf32>
    %54 = arith.addf %52, %53 : vector<8x128xf32>
    %55 = arith.negf %54 : vector<8x128xf32>
    %56 = math.exp %55 : vector<8x128xf32>
    %cst_21 = arith.constant 1.000000e+00 : f32
    %57 = vector.broadcast %cst_21 : f32 to vector<8x128xf32>
    %58 = arith.addf %57, %56 : vector<8x128xf32>
    %59 = arith.divf %57, %58 : vector<8x128xf32>
    %60 = vector.extract_strided_slice %49 {offsets = [0, 128], sizes = [8, 128], strides = [1, 1]} : vector<8x384xf32> to vector<8x128xf32>
    %61 = vector.extract_strided_slice %51 {offsets = [0, 128], sizes = [8, 128], strides = [1, 1]} : vector<8x384xf32> to vector<8x128xf32>
    %62 = arith.addf %60, %61 : vector<8x128xf32>
    %63 = arith.negf %62 : vector<8x128xf32>
    %64 = math.exp %63 : vector<8x128xf32>
    %cst_22 = arith.constant 1.000000e+00 : f32
    %65 = vector.broadcast %cst_22 : f32 to vector<8x128xf32>
    %66 = arith.addf %65, %64 : vector<8x128xf32>
    %67 = arith.divf %65, %66 : vector<8x128xf32>
    %68 = vector.extract_strided_slice %49 {offsets = [0, 256], sizes = [8, 128], strides = [1, 1]} : vector<8x384xf32> to vector<8x128xf32>
    %69 = vector.extract_strided_slice %51 {offsets = [0, 256], sizes = [8, 128], strides = [1, 1]} : vector<8x384xf32> to vector<8x128xf32>
    %70 = vector.broadcast %6 : vector<1x128xf32> to vector<8x128xf32>
    %71 = arith.addf %69, %70 : vector<8x128xf32>
    %72 = arith.mulf %59, %71 : vector<8x128xf32>
    %73 = arith.addf %68, %72 : vector<8x128xf32>
    %74 = math.tanh %73 : vector<8x128xf32>
    %cst_23 = arith.constant 1.000000e+00 : f32
    %75 = vector.broadcast %cst_23 : f32 to vector<8x128xf32>
    %76 = arith.subf %75, %67 : vector<8x128xf32>
    %77 = arith.mulf %76, %74 : vector<8x128xf32>
    %78 = arith.mulf %67, %43 : vector<8x128xf32>
    %79 = arith.addf %77, %78 : vector<8x128xf32>
    %c2_i32 = arith.constant 2 : i32
    %80 = arith.index_cast %c2_i32 : i32 to index
    %c0_24 = arith.constant 0 : index
    %c0_25 = arith.constant 0 : index
    %81 = vector.load %arg2[%80, %c0_24, %c0_25] : memref<8x8x128xbf16, #tpu.memory_space<vmem>>, vector<1x8x128xbf16>
    %82 = vector.shape_cast %81 : vector<1x8x128xbf16> to vector<8x128xbf16>
    %cst_26 = arith.constant dense<0.000000e+00> : vector<8x384xf32>
    %83 = tpu.matmul %82, %3, %cst_26 {dimension_numbers = #tpu.dot_dimension_numbers<[1], [0], [0], [1], [0, 0, 1, 1], [], []>} : vector<8x128xbf16>, vector<128x384xbf16>, vector<8x384xf32> -> vector<8x384xf32>
    %84 = vector.broadcast %5 : vector<1x384xf32> to vector<8x384xf32>
    %85 = arith.addf %83, %84 : vector<8x384xf32>
    %86 = arith.truncf %79 : vector<8x128xf32> to vector<8x128xbf16>
    %cst_27 = arith.constant dense<0.000000e+00> : vector<8x384xf32>
    %87 = tpu.matmul %86, %4, %cst_27 {dimension_numbers = #tpu.dot_dimension_numbers<[1], [0], [0], [1], [0, 0, 1, 1], [], []>} : vector<8x128xbf16>, vector<128x384xbf16>, vector<8x384xf32> -> vector<8x384xf32>
    %88 = vector.extract_strided_slice %85 {offsets = [0, 0], sizes = [8, 128], strides = [1, 1]} : vector<8x384xf32> to vector<8x128xf32>
    %89 = vector.extract_strided_slice %87 {offsets = [0, 0], sizes = [8, 128], strides = [1, 1]} : vector<8x384xf32> to vector<8x128xf32>
    %90 = arith.addf %88, %89 : vector<8x128xf32>
    %91 = arith.negf %90 : vector<8x128xf32>
    %92 = math.exp %91 : vector<8x128xf32>
    %cst_28 = arith.constant 1.000000e+00 : f32
    %93 = vector.broadcast %cst_28 : f32 to vector<8x128xf32>
    %94 = arith.addf %93, %92 : vector<8x128xf32>
    %95 = arith.divf %93, %94 : vector<8x128xf32>
    %96 = vector.extract_strided_slice %85 {offsets = [0, 128], sizes = [8, 128], strides = [1, 1]} : vector<8x384xf32> to vector<8x128xf32>
    %97 = vector.extract_strided_slice %87 {offsets = [0, 128], sizes = [8, 128], strides = [1, 1]} : vector<8x384xf32> to vector<8x128xf32>
    %98 = arith.addf %96, %97 : vector<8x128xf32>
    %99 = arith.negf %98 : vector<8x128xf32>
    %100 = math.exp %99 : vector<8x128xf32>
    %cst_29 = arith.constant 1.000000e+00 : f32
    %101 = vector.broadcast %cst_29 : f32 to vector<8x128xf32>
    %102 = arith.addf %101, %100 : vector<8x128xf32>
    %103 = arith.divf %101, %102 : vector<8x128xf32>
    %104 = vector.extract_strided_slice %85 {offsets = [0, 256], sizes = [8, 128], strides = [1, 1]} : vector<8x384xf32> to vector<8x128xf32>
    %105 = vector.extract_strided_slice %87 {offsets = [0, 256], sizes = [8, 128], strides = [1, 1]} : vector<8x384xf32> to vector<8x128xf32>
    %106 = vector.broadcast %6 : vector<1x128xf32> to vector<8x128xf32>
    %107 = arith.addf %105, %106 : vector<8x128xf32>
    %108 = arith.mulf %95, %107 : vector<8x128xf32>
    %109 = arith.addf %104, %108 : vector<8x128xf32>
    %110 = math.tanh %109 : vector<8x128xf32>
    %cst_30 = arith.constant 1.000000e+00 : f32
    %111 = vector.broadcast %cst_30 : f32 to vector<8x128xf32>
    %112 = arith.subf %111, %103 : vector<8x128xf32>
    %113 = arith.mulf %112, %110 : vector<8x128xf32>
    %114 = arith.mulf %103, %79 : vector<8x128xf32>
    %115 = arith.addf %113, %114 : vector<8x128xf32>
    %c3_i32 = arith.constant 3 : i32
    %116 = arith.index_cast %c3_i32 : i32 to index
    %c0_31 = arith.constant 0 : index
    %c0_32 = arith.constant 0 : index
    %117 = vector.load %arg2[%116, %c0_31, %c0_32] : memref<8x8x128xbf16, #tpu.memory_space<vmem>>, vector<1x8x128xbf16>
    %118 = vector.shape_cast %117 : vector<1x8x128xbf16> to vector<8x128xbf16>
    %cst_33 = arith.constant dense<0.000000e+00> : vector<8x384xf32>
    %119 = tpu.matmul %118, %3, %cst_33 {dimension_numbers = #tpu.dot_dimension_numbers<[1], [0], [0], [1], [0, 0, 1, 1], [], []>} : vector<8x128xbf16>, vector<128x384xbf16>, vector<8x384xf32> -> vector<8x384xf32>
    %120 = vector.broadcast %5 : vector<1x384xf32> to vector<8x384xf32>
    %121 = arith.addf %119, %120 : vector<8x384xf32>
    %122 = arith.truncf %115 : vector<8x128xf32> to vector<8x128xbf16>
    %cst_34 = arith.constant dense<0.000000e+00> : vector<8x384xf32>
    %123 = tpu.matmul %122, %4, %cst_34 {dimension_numbers = #tpu.dot_dimension_numbers<[1], [0], [0], [1], [0, 0, 1, 1], [], []>} : vector<8x128xbf16>, vector<128x384xbf16>, vector<8x384xf32> -> vector<8x384xf32>
    %124 = vector.extract_strided_slice %121 {offsets = [0, 0], sizes = [8, 128], strides = [1, 1]} : vector<8x384xf32> to vector<8x128xf32>
    %125 = vector.extract_strided_slice %123 {offsets = [0, 0], sizes = [8, 128], strides = [1, 1]} : vector<8x384xf32> to vector<8x128xf32>
    %126 = arith.addf %124, %125 : vector<8x128xf32>
    %127 = arith.negf %126 : vector<8x128xf32>
    %128 = math.exp %127 : vector<8x128xf32>
    %cst_35 = arith.constant 1.000000e+00 : f32
    %129 = vector.broadcast %cst_35 : f32 to vector<8x128xf32>
    %130 = arith.addf %129, %128 : vector<8x128xf32>
    %131 = arith.divf %129, %130 : vector<8x128xf32>
    %132 = vector.extract_strided_slice %121 {offsets = [0, 128], sizes = [8, 128], strides = [1, 1]} : vector<8x384xf32> to vector<8x128xf32>
    %133 = vector.extract_strided_slice %123 {offsets = [0, 128], sizes = [8, 128], strides = [1, 1]} : vector<8x384xf32> to vector<8x128xf32>
    %134 = arith.addf %132, %133 : vector<8x128xf32>
    %135 = arith.negf %134 : vector<8x128xf32>
    %136 = math.exp %135 : vector<8x128xf32>
    %cst_36 = arith.constant 1.000000e+00 : f32
    %137 = vector.broadcast %cst_36 : f32 to vector<8x128xf32>
    %138 = arith.addf %137, %136 : vector<8x128xf32>
    %139 = arith.divf %137, %138 : vector<8x128xf32>
    %140 = vector.extract_strided_slice %121 {offsets = [0, 256], sizes = [8, 128], strides = [1, 1]} : vector<8x384xf32> to vector<8x128xf32>
    %141 = vector.extract_strided_slice %123 {offsets = [0, 256], sizes = [8, 128], strides = [1, 1]} : vector<8x384xf32> to vector<8x128xf32>
    %142 = vector.broadcast %6 : vector<1x128xf32> to vector<8x128xf32>
    %143 = arith.addf %141, %142 : vector<8x128xf32>
    %144 = arith.mulf %131, %143 : vector<8x128xf32>
    %145 = arith.addf %140, %144 : vector<8x128xf32>
    %146 = math.tanh %145 : vector<8x128xf32>
    %cst_37 = arith.constant 1.000000e+00 : f32
    %147 = vector.broadcast %cst_37 : f32 to vector<8x128xf32>
    %148 = arith.subf %147, %139 : vector<8x128xf32>
    %149 = arith.mulf %148, %146 : vector<8x128xf32>
    %150 = arith.mulf %139, %115 : vector<8x128xf32>
    %151 = arith.addf %149, %150 : vector<8x128xf32>
    %c4_i32 = arith.constant 4 : i32
    %152 = arith.index_cast %c4_i32 : i32 to index
    %c0_38 = arith.constant 0 : index
    %c0_39 = arith.constant 0 : index
    %153 = vector.load %arg2[%152, %c0_38, %c0_39] : memref<8x8x128xbf16, #tpu.memory_space<vmem>>, vector<1x8x128xbf16>
    %154 = vector.shape_cast %153 : vector<1x8x128xbf16> to vector<8x128xbf16>
    %cst_40 = arith.constant dense<0.000000e+00> : vector<8x384xf32>
    %155 = tpu.matmul %154, %3, %cst_40 {dimension_numbers = #tpu.dot_dimension_numbers<[1], [0], [0], [1], [0, 0, 1, 1], [], []>} : vector<8x128xbf16>, vector<128x384xbf16>, vector<8x384xf32> -> vector<8x384xf32>
    %156 = vector.broadcast %5 : vector<1x384xf32> to vector<8x384xf32>
    %157 = arith.addf %155, %156 : vector<8x384xf32>
    %158 = arith.truncf %151 : vector<8x128xf32> to vector<8x128xbf16>
    %cst_41 = arith.constant dense<0.000000e+00> : vector<8x384xf32>
    %159 = tpu.matmul %158, %4, %cst_41 {dimension_numbers = #tpu.dot_dimension_numbers<[1], [0], [0], [1], [0, 0, 1, 1], [], []>} : vector<8x128xbf16>, vector<128x384xbf16>, vector<8x384xf32> -> vector<8x384xf32>
    %160 = vector.extract_strided_slice %157 {offsets = [0, 0], sizes = [8, 128], strides = [1, 1]} : vector<8x384xf32> to vector<8x128xf32>
    %161 = vector.extract_strided_slice %159 {offsets = [0, 0], sizes = [8, 128], strides = [1, 1]} : vector<8x384xf32> to vector<8x128xf32>
    %162 = arith.addf %160, %161 : vector<8x128xf32>
    %163 = arith.negf %162 : vector<8x128xf32>
    %164 = math.exp %163 : vector<8x128xf32>
    %cst_42 = arith.constant 1.000000e+00 : f32
    %165 = vector.broadcast %cst_42 : f32 to vector<8x128xf32>
    %166 = arith.addf %165, %164 : vector<8x128xf32>
    %167 = arith.divf %165, %166 : vector<8x128xf32>
    %168 = vector.extract_strided_slice %157 {offsets = [0, 128], sizes = [8, 128], strides = [1, 1]} : vector<8x384xf32> to vector<8x128xf32>
    %169 = vector.extract_strided_slice %159 {offsets = [0, 128], sizes = [8, 128], strides = [1, 1]} : vector<8x384xf32> to vector<8x128xf32>
    %170 = arith.addf %168, %169 : vector<8x128xf32>
    %171 = arith.negf %170 : vector<8x128xf32>
    %172 = math.exp %171 : vector<8x128xf32>
    %cst_43 = arith.constant 1.000000e+00 : f32
    %173 = vector.broadcast %cst_43 : f32 to vector<8x128xf32>
    %174 = arith.addf %173, %172 : vector<8x128xf32>
    %175 = arith.divf %173, %174 : vector<8x128xf32>
    %176 = vector.extract_strided_slice %157 {offsets = [0, 256], sizes = [8, 128], strides = [1, 1]} : vector<8x384xf32> to vector<8x128xf32>
    %177 = vector.extract_strided_slice %159 {offsets = [0, 256], sizes = [8, 128], strides = [1, 1]} : vector<8x384xf32> to vector<8x128xf32>
    %178 = vector.broadcast %6 : vector<1x128xf32> to vector<8x128xf32>
    %179 = arith.addf %177, %178 : vector<8x128xf32>
    %180 = arith.mulf %167, %179 : vector<8x128xf32>
    %181 = arith.addf %176, %180 : vector<8x128xf32>
    %182 = math.tanh %181 : vector<8x128xf32>
    %cst_44 = arith.constant 1.000000e+00 : f32
    %183 = vector.broadcast %cst_44 : f32 to vector<8x128xf32>
    %184 = arith.subf %183, %175 : vector<8x128xf32>
    %185 = arith.mulf %184, %182 : vector<8x128xf32>
    %186 = arith.mulf %175, %151 : vector<8x128xf32>
    %187 = arith.addf %185, %186 : vector<8x128xf32>
    %c5_i32 = arith.constant 5 : i32
    %188 = arith.index_cast %c5_i32 : i32 to index
    %c0_45 = arith.constant 0 : index
    %c0_46 = arith.constant 0 : index
    %189 = vector.load %arg2[%188, %c0_45, %c0_46] : memref<8x8x128xbf16, #tpu.memory_space<vmem>>, vector<1x8x128xbf16>
    %190 = vector.shape_cast %189 : vector<1x8x128xbf16> to vector<8x128xbf16>
    %cst_47 = arith.constant dense<0.000000e+00> : vector<8x384xf32>
    %191 = tpu.matmul %190, %3, %cst_47 {dimension_numbers = #tpu.dot_dimension_numbers<[1], [0], [0], [1], [0, 0, 1, 1], [], []>} : vector<8x128xbf16>, vector<128x384xbf16>, vector<8x384xf32> -> vector<8x384xf32>
    %192 = vector.broadcast %5 : vector<1x384xf32> to vector<8x384xf32>
    %193 = arith.addf %191, %192 : vector<8x384xf32>
    %194 = arith.truncf %187 : vector<8x128xf32> to vector<8x128xbf16>
    %cst_48 = arith.constant dense<0.000000e+00> : vector<8x384xf32>
    %195 = tpu.matmul %194, %4, %cst_48 {dimension_numbers = #tpu.dot_dimension_numbers<[1], [0], [0], [1], [0, 0, 1, 1], [], []>} : vector<8x128xbf16>, vector<128x384xbf16>, vector<8x384xf32> -> vector<8x384xf32>
    %196 = vector.extract_strided_slice %193 {offsets = [0, 0], sizes = [8, 128], strides = [1, 1]} : vector<8x384xf32> to vector<8x128xf32>
    %197 = vector.extract_strided_slice %195 {offsets = [0, 0], sizes = [8, 128], strides = [1, 1]} : vector<8x384xf32> to vector<8x128xf32>
    %198 = arith.addf %196, %197 : vector<8x128xf32>
    %199 = arith.negf %198 : vector<8x128xf32>
    %200 = math.exp %199 : vector<8x128xf32>
    %cst_49 = arith.constant 1.000000e+00 : f32
    %201 = vector.broadcast %cst_49 : f32 to vector<8x128xf32>
    %202 = arith.addf %201, %200 : vector<8x128xf32>
    %203 = arith.divf %201, %202 : vector<8x128xf32>
    %204 = vector.extract_strided_slice %193 {offsets = [0, 128], sizes = [8, 128], strides = [1, 1]} : vector<8x384xf32> to vector<8x128xf32>
    %205 = vector.extract_strided_slice %195 {offsets = [0, 128], sizes = [8, 128], strides = [1, 1]} : vector<8x384xf32> to vector<8x128xf32>
    %206 = arith.addf %204, %205 : vector<8x128xf32>
    %207 = arith.negf %206 : vector<8x128xf32>
    %208 = math.exp %207 : vector<8x128xf32>
    %cst_50 = arith.constant 1.000000e+00 : f32
    %209 = vector.broadcast %cst_50 : f32 to vector<8x128xf32>
    %210 = arith.addf %209, %208 : vector<8x128xf32>
    %211 = arith.divf %209, %210 : vector<8x128xf32>
    %212 = vector.extract_strided_slice %193 {offsets = [0, 256], sizes = [8, 128], strides = [1, 1]} : vector<8x384xf32> to vector<8x128xf32>
    %213 = vector.extract_strided_slice %195 {offsets = [0, 256], sizes = [8, 128], strides = [1, 1]} : vector<8x384xf32> to vector<8x128xf32>
    %214 = vector.broadcast %6 : vector<1x128xf32> to vector<8x128xf32>
    %215 = arith.addf %213, %214 : vector<8x128xf32>
    %216 = arith.mulf %203, %215 : vector<8x128xf32>
    %217 = arith.addf %212, %216 : vector<8x128xf32>
    %218 = math.tanh %217 : vector<8x128xf32>
    %cst_51 = arith.constant 1.000000e+00 : f32
    %219 = vector.broadcast %cst_51 : f32 to vector<8x128xf32>
    %220 = arith.subf %219, %211 : vector<8x128xf32>
    %221 = arith.mulf %220, %218 : vector<8x128xf32>
    %222 = arith.mulf %211, %187 : vector<8x128xf32>
    %223 = arith.addf %221, %222 : vector<8x128xf32>
    %c6_i32 = arith.constant 6 : i32
    %224 = arith.index_cast %c6_i32 : i32 to index
    %c0_52 = arith.constant 0 : index
    %c0_53 = arith.constant 0 : index
    %225 = vector.load %arg2[%224, %c0_52, %c0_53] : memref<8x8x128xbf16, #tpu.memory_space<vmem>>, vector<1x8x128xbf16>
    %226 = vector.shape_cast %225 : vector<1x8x128xbf16> to vector<8x128xbf16>
    %cst_54 = arith.constant dense<0.000000e+00> : vector<8x384xf32>
    %227 = tpu.matmul %226, %3, %cst_54 {dimension_numbers = #tpu.dot_dimension_numbers<[1], [0], [0], [1], [0, 0, 1, 1], [], []>} : vector<8x128xbf16>, vector<128x384xbf16>, vector<8x384xf32> -> vector<8x384xf32>
    %228 = vector.broadcast %5 : vector<1x384xf32> to vector<8x384xf32>
    %229 = arith.addf %227, %228 : vector<8x384xf32>
    %230 = arith.truncf %223 : vector<8x128xf32> to vector<8x128xbf16>
    %cst_55 = arith.constant dense<0.000000e+00> : vector<8x384xf32>
    %231 = tpu.matmul %230, %4, %cst_55 {dimension_numbers = #tpu.dot_dimension_numbers<[1], [0], [0], [1], [0, 0, 1, 1], [], []>} : vector<8x128xbf16>, vector<128x384xbf16>, vector<8x384xf32> -> vector<8x384xf32>
    %232 = vector.extract_strided_slice %229 {offsets = [0, 0], sizes = [8, 128], strides = [1, 1]} : vector<8x384xf32> to vector<8x128xf32>
    %233 = vector.extract_strided_slice %231 {offsets = [0, 0], sizes = [8, 128], strides = [1, 1]} : vector<8x384xf32> to vector<8x128xf32>
    %234 = arith.addf %232, %233 : vector<8x128xf32>
    %235 = arith.negf %234 : vector<8x128xf32>
    %236 = math.exp %235 : vector<8x128xf32>
    %cst_56 = arith.constant 1.000000e+00 : f32
    %237 = vector.broadcast %cst_56 : f32 to vector<8x128xf32>
    %238 = arith.addf %237, %236 : vector<8x128xf32>
    %239 = arith.divf %237, %238 : vector<8x128xf32>
    %240 = vector.extract_strided_slice %229 {offsets = [0, 128], sizes = [8, 128], strides = [1, 1]} : vector<8x384xf32> to vector<8x128xf32>
    %241 = vector.extract_strided_slice %231 {offsets = [0, 128], sizes = [8, 128], strides = [1, 1]} : vector<8x384xf32> to vector<8x128xf32>
    %242 = arith.addf %240, %241 : vector<8x128xf32>
    %243 = arith.negf %242 : vector<8x128xf32>
    %244 = math.exp %243 : vector<8x128xf32>
    %cst_57 = arith.constant 1.000000e+00 : f32
    %245 = vector.broadcast %cst_57 : f32 to vector<8x128xf32>
    %246 = arith.addf %245, %244 : vector<8x128xf32>
    %247 = arith.divf %245, %246 : vector<8x128xf32>
    %248 = vector.extract_strided_slice %229 {offsets = [0, 256], sizes = [8, 128], strides = [1, 1]} : vector<8x384xf32> to vector<8x128xf32>
    %249 = vector.extract_strided_slice %231 {offsets = [0, 256], sizes = [8, 128], strides = [1, 1]} : vector<8x384xf32> to vector<8x128xf32>
    %250 = vector.broadcast %6 : vector<1x128xf32> to vector<8x128xf32>
    %251 = arith.addf %249, %250 : vector<8x128xf32>
    %252 = arith.mulf %239, %251 : vector<8x128xf32>
    %253 = arith.addf %248, %252 : vector<8x128xf32>
    %254 = math.tanh %253 : vector<8x128xf32>
    %cst_58 = arith.constant 1.000000e+00 : f32
    %255 = vector.broadcast %cst_58 : f32 to vector<8x128xf32>
    %256 = arith.subf %255, %247 : vector<8x128xf32>
    %257 = arith.mulf %256, %254 : vector<8x128xf32>
    %258 = arith.mulf %247, %223 : vector<8x128xf32>
    %259 = arith.addf %257, %258 : vector<8x128xf32>
    %c7_i32 = arith.constant 7 : i32
    %260 = arith.index_cast %c7_i32 : i32 to index
    %c0_59 = arith.constant 0 : index
    %c0_60 = arith.constant 0 : index
    %261 = vector.load %arg2[%260, %c0_59, %c0_60] : memref<8x8x128xbf16, #tpu.memory_space<vmem>>, vector<1x8x128xbf16>
    %262 = vector.shape_cast %261 : vector<1x8x128xbf16> to vector<8x128xbf16>
    %cst_61 = arith.constant dense<0.000000e+00> : vector<8x384xf32>
    %263 = tpu.matmul %262, %3, %cst_61 {dimension_numbers = #tpu.dot_dimension_numbers<[1], [0], [0], [1], [0, 0, 1, 1], [], []>} : vector<8x128xbf16>, vector<128x384xbf16>, vector<8x384xf32> -> vector<8x384xf32>
    %264 = vector.broadcast %5 : vector<1x384xf32> to vector<8x384xf32>
    %265 = arith.addf %263, %264 : vector<8x384xf32>
    %266 = arith.truncf %259 : vector<8x128xf32> to vector<8x128xbf16>
    %cst_62 = arith.constant dense<0.000000e+00> : vector<8x384xf32>
    %267 = tpu.matmul %266, %4, %cst_62 {dimension_numbers = #tpu.dot_dimension_numbers<[1], [0], [0], [1], [0, 0, 1, 1], [], []>} : vector<8x128xbf16>, vector<128x384xbf16>, vector<8x384xf32> -> vector<8x384xf32>
    %268 = vector.extract_strided_slice %265 {offsets = [0, 0], sizes = [8, 128], strides = [1, 1]} : vector<8x384xf32> to vector<8x128xf32>
    %269 = vector.extract_strided_slice %267 {offsets = [0, 0], sizes = [8, 128], strides = [1, 1]} : vector<8x384xf32> to vector<8x128xf32>
    %270 = arith.addf %268, %269 : vector<8x128xf32>
    %271 = arith.negf %270 : vector<8x128xf32>
    %272 = math.exp %271 : vector<8x128xf32>
    %cst_63 = arith.constant 1.000000e+00 : f32
    %273 = vector.broadcast %cst_63 : f32 to vector<8x128xf32>
    %274 = arith.addf %273, %272 : vector<8x128xf32>
    %275 = arith.divf %273, %274 : vector<8x128xf32>
    %276 = vector.extract_strided_slice %265 {offsets = [0, 128], sizes = [8, 128], strides = [1, 1]} : vector<8x384xf32> to vector<8x128xf32>
    %277 = vector.extract_strided_slice %267 {offsets = [0, 128], sizes = [8, 128], strides = [1, 1]} : vector<8x384xf32> to vector<8x128xf32>
    %278 = arith.addf %276, %277 : vector<8x128xf32>
    %279 = arith.negf %278 : vector<8x128xf32>
    %280 = math.exp %279 : vector<8x128xf32>
    %cst_64 = arith.constant 1.000000e+00 : f32
    %281 = vector.broadcast %cst_64 : f32 to vector<8x128xf32>
    %282 = arith.addf %281, %280 : vector<8x128xf32>
    %283 = arith.divf %281, %282 : vector<8x128xf32>
    %284 = vector.extract_strided_slice %265 {offsets = [0, 256], sizes = [8, 128], strides = [1, 1]} : vector<8x384xf32> to vector<8x128xf32>
    %285 = vector.extract_strided_slice %267 {offsets = [0, 256], sizes = [8, 128], strides = [1, 1]} : vector<8x384xf32> to vector<8x128xf32>
    %286 = vector.broadcast %6 : vector<1x128xf32> to vector<8x128xf32>
    %287 = arith.addf %285, %286 : vector<8x128xf32>
    %288 = arith.mulf %275, %287 : vector<8x128xf32>
    %289 = arith.addf %284, %288 : vector<8x128xf32>
    %290 = math.tanh %289 : vector<8x128xf32>
    %cst_65 = arith.constant 1.000000e+00 : f32
    %291 = vector.broadcast %cst_65 : f32 to vector<8x128xf32>
    %292 = arith.subf %291, %283 : vector<8x128xf32>
    %293 = arith.mulf %292, %290 : vector<8x128xf32>
    %294 = arith.mulf %283, %259 : vector<8x128xf32>
    %295 = arith.addf %293, %294 : vector<8x128xf32>
    %c8_i32 = arith.constant 8 : i32
    %c0_66 = arith.constant 0 : index
    %c0_67 = arith.constant 0 : index
    %296 = vector.load %arg7[%c0_66, %c0_67] : memref<8x128xf32, #tpu.memory_space<vmem>>, vector<8x128xf32>
    tpu.vector_store %arg7[%c0_66, %c0_67], %295 {strides = array<i32>} : memref<8x128xf32, #tpu.memory_space<vmem>>, vector<8x128xf32>,
    return
  }
  func.func @transform_0(%arg0: i32, %arg1: i32) -> (i32, i32, i32) {
    %c0_i32 = arith.constant 0 : i32
    %c0_i32_0 = arith.constant 0 : i32
    return %arg1, %arg0, %c0_i32 : i32, i32, i32
  }
  func.func @transform_3(%arg0: i32, %arg1: i32) -> (i32, i32) {
    %c0_i32 = arith.constant 0 : i32
    %c0_i32_0 = arith.constant 0 : i32
    %c0_i32_1 = arith.constant 0 : i32
    return %c0_i32, %c0_i32_0 : i32, i32
  }
  func.func @transform_4(%arg0: i32, %arg1: i32) -> (i32, i32) {
    %c0_i32 = arith.constant 0 : i32
    %c0_i32_0 = arith.constant 0 : i32
    %c0_i32_1 = arith.constant 0 : i32
    return %c0_i32, %c0_i32_0 : i32, i32
  }
  func.func @transform_5(%arg0: i32, %arg1: i32) -> (i32, i32) {
    %c0_i32 = arith.constant 0 : i32
    %c0_i32_0 = arith.constant 0 : i32
    return %arg0, %c0_i32 : i32, i32
  }
}

</mosaic_0001>

<llo_original>
// kernel: tpu_custom_call.1
$region0: #{tpu_custom_call.1}
  #allocation0 [shape = 'u32[]', space=smem, size = 0x4, offset = 0x4, fixed_abs, tag = 'smem constant byte address 0x4 - core index']
  #allocation1 [shape = 'u32[144,128]{1,0:T(1,128)}', space=vmem, size = 0x12000, scoped, tag = 'internal scratch']
  #allocation2 [shape = 'bf16[128,384]{1,0:T(16,128)(2,1)}', space=vmem, size = 0x18000, scoped, tag = 'scratch operand']
  #allocation3 [shape = 'bf16[128,384]{1,0:T(16,128)(2,1)}', space=vmem, size = 0x18000, scoped, tag = 'scratch operand']
  #allocation4 [shape = 's32[2]{0}', space=sflag, size = 0x8, scoped, tag = 'scratch operand']
  #allocation9 [shape = 's32[]', space=sflag, size = 0x4, offset = 0, fixed_abs, tag = 'sflag constant byte address 0x0 - dummy sync flag']
  #allocation11 [shape = 's32[]', space=sflag, size = 0x4, offset = 0, fixed_abs, tag = 'sflag constant byte address 0x0 - dummy sync flag']
  %s0 = inlined_call_operand.hbm [shape: bf16[8,8,128], index: 0, kind: input, shape index: {}]
  %s1 = inlined_call_operand.hbm [shape: bf16[128,384], index: 1, kind: input, shape index: {}]
  %s2 = inlined_call_operand.hbm [shape: bf16[128,384], index: 2, kind: input, shape index: {}]
  %s3 = inlined_call_operand.vmem [shape: f32[1,384], index: 3, kind: input, shape index: {}]
  %s4 = inlined_call_operand.vmem [shape: f32[1,128], index: 4, kind: input, shape index: {}]
  %s5 = inlined_call_operand.hbm [shape: f32[8,128], index: 5, kind: output, shape index: {}]
  %s6 = sld [smem:[#allocation0]]
  $region30: #{tpu_custom_call.1} parent=0
    _
  %s8 = ssub.s32 1, %s6
  %s9 = scalar_select 0, %s8, %s6
  $region1: #{tpu_custom_call.1} parent=0
    #allocation5 [shape = 'u8[16384]{0}', space=vmem, size = 0x4000, scoped, tag = 'input window, operand 0, single buffered']
    #allocation6 [shape = 's32[1]{0}', space=sflag, size = 0x4, scoped, tag = 'scoped memory for tpu_custom_call.1']
    #allocation7 [shape = 's32[1]{0}', space=sflag, size = 0x4, scoped, tag = 'scoped memory for tpu_custom_call.1']
    #allocation8 [shape = 'u8[4096]{0}', space=vmem, size = 0x1000, scoped, tag = 'output window, operand 0, single buffered']
    %10 = vsyncpa [#allocation6], 0
    %11 = vsyncpa [#allocation7], 0
    // Predicated region
    $region2: #{tpu_custom_call.1} parent=1 // pred_check
      _
    $region3: #{tpu_custom_call.1} parent=1 // pred_check_branch
      %13 = sbr.rel (0) target = $region5
    $region4: #{tpu_custom_call.1} parent=1 // pred_region
      %s15 = ssub.s32 512, 512
      %16 = vsyncadd [#allocation6], %s15
      %s17 = sshll.u32 [#allocation5], 4
      %s18 = int_to_ptr.vmem [resolvable:$true] %s17
      %23 = dma.hbm_to_vmem [thread:$0]  %s0, 512, %s18, [#allocation6], 64, 64, 4
    $region5: #{tpu_custom_call.1} parent=1 // pred_fallthru
      _
    // Predicated region
    $region6: #{tpu_custom_call.1} parent=1 // pred_check
      _
    $region7: #{tpu_custom_call.1} parent=1 // pred_check_branch
      %25 = sbr.rel (0) target = $region9
    $region8: #{tpu_custom_call.1} parent=1 // pred_region
      _
    $region9: #{tpu_custom_call.1} parent=1 // pred_fallthru
      _
    // Predicated region
    $region10: #{tpu_custom_call.1} parent=1 // pred_check
      _
    $region11: #{tpu_custom_call.1} parent=1 // pred_check_branch
      %27 = sbr.rel (0) target = $region13
    $region12: #{tpu_custom_call.1} parent=1 // pred_region
      _
    $region13: #{tpu_custom_call.1} parent=1 // pred_fallthru
      _
    // Predicated region
    $region14: #{tpu_custom_call.1} parent=1 // pred_check
      _
    $region15: #{tpu_custom_call.1} parent=1 // pred_check_branch
      %29 = sbr.rel (0) target = $region17
    $region16: #{tpu_custom_call.1} parent=1 // pred_region
      %30 = dma.done [#allocation6], 512
    $region17: #{tpu_custom_call.1} parent=1 // pred_fallthru
      _
    %p32 = scmp.eq.s32.totalorder 0, 0
    // Predicated region
    $region18: #{tpu_custom_call.1} parent=1 // pred_check
      %p33 = pneg %p32
    $region19: #{tpu_custom_call.1} parent=1 // pred_check_branch
      %35 = sbr.rel (%p33) target = $region21
    $region20: #{tpu_custom_call.1} parent=1 // pred_region
      #allocation10 [shape = 'u32[9]{0}', space=smem, size = 0x24, scoped, tag = 'DMA stride descriptor']
      #allocation12 [shape = 'u32[9]{0}', space=smem, size = 0x24, scoped, tag = 'DMA stride descriptor']
      %s37 = sshll.u32 1, 14
      %s38 = sxor.u32 4294967295, %s37
      %s40 = sld [smem:[#allocation0]]
      %s41 = sadd.s32 2, %s40
      %s43 = sshll.u32 7, 26
      %s44 = sxor.u32 4294967295, %s43
      %s45 = sand.u32 0, %s44
      %s46 = sshll.u32 %s41, 26
      %s47 = sor.u32 %s45, %s46
      %s48 = sshll.u32 [#allocation2], 4
      %s49 = int_to_ptr.vmem [resolvable:$true] %s48
      %52 = sst [smem:[#allocation10]] 384
      %s53 = scalar_lea.smem [#allocation10], 1
      %54 = sst [smem:[%s53]] 384
      %s55 = scalar_lea.smem [#allocation10], 2
      %56 = sst [smem:[%s55]] 3
      %s57 = scalar_lea.smem [#allocation10], 3
      %58 = sst [smem:[%s57]] 64
      %s59 = scalar_lea.smem [#allocation10], 4
      %60 = sst [smem:[%s59]] 128
      %s61 = scalar_lea.smem [#allocation10], 5
      %62 = sst [smem:[%s61]] 2
      %s63 = scalar_lea.smem [#allocation10], 6
      %64 = sst [smem:[%s63]] 192
      %s65 = scalar_lea.smem [#allocation10], 7
      %66 = sst [smem:[%s65]] 64
      %s67 = scalar_lea.smem [#allocation10], 8
      %68 = sst [smem:[%s67]] 4
      %70 = dma.general %s1, 3072, %s49, [#allocation4], [#allocation9], [#allocation10], %s47, 0
      %s71 = scalar_lea.sflag [#allocation4], 1
      %s73 = sshll.u32 1, 14
      %s74 = sxor.u32 4294967295, %s73
      %s76 = sadd.s32 2, %s40
      %s78 = sshll.u32 7, 26
      %s79 = sxor.u32 4294967295, %s78
      %s80 = sand.u32 0, %s79
      %s81 = sshll.u32 %s76, 26
      %s82 = sor.u32 %s80, %s81
      %s83 = sshll.u32 [#allocation3], 4
      %s84 = int_to_ptr.vmem [resolvable:$true] %s83
      %87 = sst [smem:[#allocation12]] 384
      %s88 = scalar_lea.smem [#allocation12], 1
      %89 = sst [smem:[%s88]] 384
      %s90 = scalar_lea.smem [#allocation12], 2
      %91 = sst [smem:[%s90]] 3
      %s92 = scalar_lea.smem [#allocation12], 3
      %93 = sst [smem:[%s92]] 64
      %s94 = scalar_lea.smem [#allocation12], 4
      %95 = sst [smem:[%s94]] 128
      %s96 = scalar_lea.smem [#allocation12], 5
      %97 = sst [smem:[%s96]] 2
      %s98 = scalar_lea.smem [#allocation12], 6
      %99 = sst [smem:[%s98]] 192
      %s100 = scalar_lea.smem [#allocation12], 7
      %101 = sst [smem:[%s100]] 64
      %s102 = scalar_lea.smem [#allocation12], 8
      %103 = sst [smem:[%s102]] 4
      %105 = dma.general %s2, 3072, %s84, %s71, [#allocation11], [#allocation12], %s82, 0
      %s106 = smul.u32 4, 16
      %s107 = smul.u32 %s106, 3
      %s108 = sshll.u32 %s107, 4
      %109 = dma.done [#allocation4], %s108
      %s110 = sshll.u32 %s107, 4
      %111 = dma.done %s71, %s110
      %112 = vst [vmem:[#allocation8] sm:$0xff] 0.0
    $region21: #{tpu_custom_call.1} parent=1 // pred_fallthru
      _
    %v113 = vld [vmem:[#allocation2] sm:$0xff]
    %v114 = vld [vmem:[#allocation2 + $0x8] sm:$0xff]
    %v115 = vld [vmem:[#allocation2 + $0x10] sm:$0xff]
    %v116 = vld [vmem:[#allocation2 + $0x18] sm:$0xff]
    %v117 = vld [vmem:[#allocation2 + $0x20] sm:$0xff]
    %v118 = vld [vmem:[#allocation2 + $0x28] sm:$0xff]
    %v119 = vld [vmem:[#allocation2 + $0x30] sm:$0xff]
    %v120 = vld [vmem:[#allocation2 + $0x38] sm:$0xff]
    %v121 = vld [vmem:[#allocation2 + $0x40] sm:$0xff]
    %v122 = vld [vmem:[#allocation2 + $0x48] sm:$0xff]
    %v123 = vld [vmem:[#allocation2 + $0x50] sm:$0xff]
    %v124 = vld [vmem:[#allocation2 + $0x58] sm:$0xff]
    %v125 = vld [vmem:[#allocation2 + $0x60] sm:$0xff]
    %v126 = vld [vmem:[#allocation2 + $0x68] sm:$0xff]
    %v127 = vld [vmem:[#allocation2 + $0x70] sm:$0xff]
    %v128 = vld [vmem:[#allocation2 + $0x78] sm:$0xff]
    %v129 = vld [vmem:[#allocation2 + $0x80] sm:$0xff]
    %v130 = vld [vmem:[#allocation2 + $0x88] sm:$0xff]
    %v131 = vld [vmem:[#allocation2 + $0x90] sm:$0xff]
    %v132 = vld [vmem:[#allocation2 + $0x98] sm:$0xff]
    %v133 = vld [vmem:[#allocation2 + $0xa0] sm:$0xff]
    %v134 = vld [vmem:[#allocation2 + $0xa8] sm:$0xff]
    %v135 = vld [vmem:[#allocation2 + $0xb0] sm:$0xff]
    %v136 = vld [vmem:[#allocation2 + $0xb8] sm:$0xff]
    %v137 = vld [vmem:[#allocation3] sm:$0xff]
    %v138 = vld [vmem:[#allocation3 + $0x8] sm:$0xff]
    %v139 = vld [vmem:[#allocation3 + $0x10] sm:$0xff]
    %v140 = vld [vmem:[#allocation3 + $0x18] sm:$0xff]
    %v141 = vld [vmem:[#allocation3 + $0x20] sm:$0xff]
    %v142 = vld [vmem:[#allocation3 + $0x28] sm:$0xff]
    %v143 = vld [vmem:[#allocation3 + $0x30] sm:$0xff]
    %v144 = vld [vmem:[#allocation3 + $0x38] sm:$0xff]
    %v145 = vld [vmem:[#allocation3 + $0x40] sm:$0xff]
    %v146 = vld [vmem:[#allocation3 + $0x48] sm:$0xff]
    %v147 = vld [vmem:[#allocation3 + $0x50] sm:$0xff]
    %v148 = vld [vmem:[#allocation3 + $0x58] sm:$0xff]
    %v149 = vld [vmem:[#allocation3 + $0x60] sm:$0xff]
    %v150 = vld [vmem:[#allocation3 + $0x68] sm:$0xff]
    %v151 = vld [vmem:[#allocation3 + $0x70] sm:$0xff]
    %v152 = vld [vmem:[#allocation3 + $0x78] sm:$0xff]
    %v153 = vld [vmem:[#allocation3 + $0x80] sm:$0xff]
    %v154 = vld [vmem:[#allocation3 + $0x88] sm:$0xff]
    %v155 = vld [vmem:[#allocation3 + $0x90] sm:$0xff]
    %v156 = vld [vmem:[#allocation3 + $0x98] sm:$0xff]
    %v157 = vld [vmem:[#allocation3 + $0xa0] sm:$0xff]
    %v158 = vld [vmem:[#allocation3 + $0xa8] sm:$0xff]
    %v159 = vld [vmem:[#allocation3 + $0xb0] sm:$0xff]
    %v160 = vld [vmem:[#allocation3 + $0xb8] sm:$0xff]
    %v161 = vld [vmem:[%s3] sm:$0x7]
    %v162 = vld [vmem:[%s4] sm:$0x1]
    %v163 = vld [vmem:[#allocation8] sm:$0xff]
    %v164 = vld [vmem:[#allocation5] sm:$0xf]
    %v166 = vlaneseq
    %v167 = vshrl.u32 %v166, 7
    %v168 = vsub.s32 0, %v167
    %v169 = vrot.slane %v161, %v168
    %v170 = vlaneseq
    %v171 = vshrl.u32 %v170, 7
    %v172 = vsub.s32 1, %v171
    %v173 = vrot.slane %v161, %v172
    %v174 = vlaneseq
    %v175 = vshrl.u32 %v174, 7
    %v176 = vsub.s32 2, %v175
    %v177 = vrot.slane %v161, %v176
    %181 = vmatprep.subr.bf16.mxu0 %v114
    %182 = vmatpush1.bf16.msra.mxu0 %v113
    %183 = vmatprep.subr.bf16.mxu0 %v117
    %184 = vmatpush1.bf16.msra.mxu0 %v116
    %185 = vmatprep.subr.bf16.mxu0 %v120
    %186 = vmatpush1.bf16.msra.mxu0 %v119
    %187 = vmatprep.subr.bf16.mxu0 %v123
    %188 = vmatpush1.bf16.msra.mxu0 %v122
    %189 = vmatprep.subr.bf16.mxu0 %v126
    %190 = vmatpush1.bf16.msra.mxu0 %v125
    %191 = vmatprep.subr.bf16.mxu0 %v129
    %192 = vmatpush1.bf16.msra.mxu0 %v128
    %193 = vmatprep.subr.bf16.mxu0 %v132
    %194 = vmatpush1.bf16.msra.mxu0 %v131
    %195 = vmatprep.subr.bf16.mxu0 %v135
    %196 = vmatpush1.bf16.msra.mxu0 %v134
    %197 = vmatprep.subr.bf16.mxu0 0
    %198 = vmatpush1.bf16.msra.mxu0 0
    %199 = vmatprep.subr.bf16.mxu0 0
    %200 = vmatpush1.bf16.msra.mxu0 0
    %201 = vmatprep.subr.bf16.mxu0 0
    %202 = vmatpush1.bf16.msra.mxu0 0
    %203 = vmatprep.subr.bf16.mxu0 0
    %204 = vmatpush1.bf16.msra.mxu0 0
    %205 = vmatprep.subr.bf16.mxu0 0
    %206 = vmatpush1.bf16.msra.mxu0 0
    %207 = vmatprep.subr.bf16.mxu0 0
    %208 = vmatpush1.bf16.msra.mxu0 0
    %209 = vmatprep.subr.bf16.mxu0 0
    %210 = vmatpush1.bf16.msra.mxu0 0
    %211 = vmatprep.subr.bf16.mxu0 0
    %212 = vmatpush1.bf16.msra.mxu0 0
    %213 = vmatprep.mubr.bf16.mxu0 0
    %214 = vmatmul.mubr.bf16.gmra.mrb[0].mxu0 %v164
    %v215 = vpop.f32.mrb[0].mxu0
    %v216 = vadd.f32 %v169, %v215
    %v217 = vpop.f32.mrb[0].mxu0
    %v218 = vadd.f32 %v173, %v217
    %v219 = vpop.f32.mrb[0].mxu0
    %v220 = vpop.f32.mrb[0].mxu0
    %221 = vdwg.mxu0
    %222 = vmatprep.subr.bf16.mxu0 0
    %223 = vmatpush1.bf16.msra.mxu0 %v115
    %224 = vmatprep.subr.bf16.mxu0 0
    %225 = vmatpush1.bf16.msra.mxu0 %v118
    %226 = vmatprep.subr.bf16.mxu0 0
    %227 = vmatpush1.bf16.msra.mxu0 %v121
    %228 = vmatprep.subr.bf16.mxu0 0
    %229 = vmatpush1.bf16.msra.mxu0 %v124
    %230 = vmatprep.subr.bf16.mxu0 0
    %231 = vmatpush1.bf16.msra.mxu0 %v127
    %232 = vmatprep.subr.bf16.mxu0 0
    %233 = vmatpush1.bf16.msra.mxu0 %v130
    %234 = vmatprep.subr.bf16.mxu0 0
    %235 = vmatpush1.bf16.msra.mxu0 %v133
    %236 = vmatprep.subr.bf16.mxu0 0
    %237 = vmatpush1.bf16.msra.mxu0 %v136
    %238 = vmatprep.subr.bf16.mxu0 0
    %239 = vmatpush1.bf16.msra.mxu0 0
    %240 = vmatprep.subr.bf16.mxu0 0
    %241 = vmatpush1.bf16.msra.mxu0 0
    %242 = vmatprep.subr.bf16.mxu0 0
    %243 = vmatpush1.bf16.msra.mxu0 0
    %244 = vmatprep.subr.bf16.mxu0 0
    %245 = vmatpush1.bf16.msra.mxu0 0
    %246 = vmatprep.subr.bf16.mxu0 0
    %247 = vmatpush1.bf16.msra.mxu0 0
    %248 = vmatprep.subr.bf16.mxu0 0
    %249 = vmatpush1.bf16.msra.mxu0 0
    %250 = vmatprep.subr.bf16.mxu0 0
    %251 = vmatpush1.bf16.msra.mxu0 0
    %252 = vmatprep.subr.bf16.mxu0 0
    %253 = vmatpush1.bf16.msra.mxu0 0
    %254 = vmatprep.mubr.bf16.mxu0 0
    %255 = vmatmul.mubr.bf16.gmra.mrb[0].mxu0 %v164
    %v256 = vpop.f32.mrb[0].mxu0
    %v257 = vadd.f32 %v177, %v256
    %v258 = vpop.f32.mrb[0].mxu0
    %v259 = vpop.f32.mrb[0].mxu0
    %v260 = vpop.f32.mrb[0].mxu0
    %261 = vdwg.mxu0
    %v262 = vpack.c.bf16 %v163, %v163
    %263 = vmatprep.subr.bf16.mxu0 %v138
    %264 = vmatpush1.bf16.msra.mxu0 %v137
    %265 = vmatprep.subr.bf16.mxu0 %v141
    %266 = vmatpush1.bf16.msra.mxu0 %v140
    %267 = vmatprep.subr.bf16.mxu0 %v144
    %268 = vmatpush1.bf16.msra.mxu0 %v143
    %269 = vmatprep.subr.bf16.mxu0 %v147
    %270 = vmatpush1.bf16.msra.mxu0 %v146
    %271 = vmatprep.subr.bf16.mxu0 %v150
    %272 = vmatpush1.bf16.msra.mxu0 %v149
    %273 = vmatprep.subr.bf16.mxu0 %v153
    %274 = vmatpush1.bf16.msra.mxu0 %v152
    %275 = vmatprep.subr.bf16.mxu0 %v156
    %276 = vmatpush1.bf16.msra.mxu0 %v155
    %277 = vmatprep.subr.bf16.mxu0 %v159
    %278 = vmatpush1.bf16.msra.mxu0 %v158
    %279 = vmatprep.subr.bf16.mxu0 0
    %280 = vmatpush1.bf16.msra.mxu0 0
    %281 = vmatprep.subr.bf16.mxu0 0
    %282 = vmatpush1.bf16.msra.mxu0 0
    %283 = vmatprep.subr.bf16.mxu0 0
    %284 = vmatpush1.bf16.msra.mxu0 0
    %285 = vmatprep.subr.bf16.mxu0 0
    %286 = vmatpush1.bf16.msra.mxu0 0
    %287 = vmatprep.subr.bf16.mxu0 0
    %288 = vmatpush1.bf16.msra.mxu0 0
    %289 = vmatprep.subr.bf16.mxu0 0
    %290 = vmatpush1.bf16.msra.mxu0 0
    %291 = vmatprep.subr.bf16.mxu0 0
    %292 = vmatpush1.bf16.msra.mxu0 0
    %293 = vmatprep.subr.bf16.mxu0 0
    %294 = vmatpush1.bf16.msra.mxu0 0
    %295 = vmatprep.mubr.bf16.mxu0 0
    %296 = vmatmul.mubr.bf16.gmra.mrb[0].mxu0 %v262
    %v297 = vpop.f32.mrb[0].mxu0
    %v298 = vadd.f32 0.0, %v297
    %v299 = vpop.f32.mrb[0].mxu0
    %v300 = vadd.f32 0.0, %v299
    %v301 = vpop.f32.mrb[0].mxu0
    %v302 = vpop.f32.mrb[0].mxu0
    %303 = vdwg.mxu0
    %304 = vmatprep.subr.bf16.mxu0 0
    %305 = vmatpush1.bf16.msra.mxu0 %v139
    %306 = vmatprep.subr.bf16.mxu0 0
    %307 = vmatpush1.bf16.msra.mxu0 %v142
    %308 = vmatprep.subr.bf16.mxu0 0
    %309 = vmatpush1.bf16.msra.mxu0 %v145
    %310 = vmatprep.subr.bf16.mxu0 0
    %311 = vmatpush1.bf16.msra.mxu0 %v148
    %312 = vmatprep.subr.bf16.mxu0 0
    %313 = vmatpush1.bf16.msra.mxu0 %v151
    %314 = vmatprep.subr.bf16.mxu0 0
    %315 = vmatpush1.bf16.msra.mxu0 %v154
    %316 = vmatprep.subr.bf16.mxu0 0
    %317 = vmatpush1.bf16.msra.mxu0 %v157
    %318 = vmatprep.subr.bf16.mxu0 0
    %319 = vmatpush1.bf16.msra.mxu0 %v160
    %320 = vmatprep.subr.bf16.mxu0 0
    %321 = vmatpush1.bf16.msra.mxu0 0
    %322 = vmatprep.subr.bf16.mxu0 0
    %323 = vmatpush1.bf16.msra.mxu0 0
    %324 = vmatprep.subr.bf16.mxu0 0
    %325 = vmatpush1.bf16.msra.mxu0 0
    %326 = vmatprep.subr.bf16.mxu0 0
    %327 = vmatpush1.bf16.msra.mxu0 0
    %328 = vmatprep.subr.bf16.mxu0 0
    %329 = vmatpush1.bf16.msra.mxu0 0
    %330 = vmatprep.subr.bf16.mxu0 0
    %331 = vmatpush1.bf16.msra.mxu0 0
    %332 = vmatprep.subr.bf16.mxu0 0
    %333 = vmatpush1.bf16.msra.mxu0 0
    %334 = vmatprep.subr.bf16.mxu0 0
    %335 = vmatpush1.bf16.msra.mxu0 0
    %336 = vmatprep.mubr.bf16.mxu0 0
    %337 = vmatmul.mubr.bf16.gmra.mrb[0].mxu0 %v262
    %v338 = vpop.f32.mrb[0].mxu0
    %v339 = vadd.f32 0.0, %v338
    %v340 = vpop.f32.mrb[0].mxu0
    %v341 = vpop.f32.mrb[0].mxu0
    %v342 = vpop.f32.mrb[0].mxu0
    %343 = vdwg.mxu0
    %v344 = vadd.f32 %v216, %v298
    %v345 = vxor.u32 %v344, 2147483648
    %v346 = vmul.f32 %v345, 1.442695
    %v347 = vpow.pop %v346
    %v348 = vadd.f32 %v347, 1.0
    %v349 = vrcp.pop %v348
    %v350 = vmul.f32 1.0, %v349
    %v351 = vadd.f32 %v218, %v300
    %v352 = vxor.u32 %v351, 2147483648
    %v353 = vmul.f32 %v352, 1.442695
    %v354 = vpow.pop %v353
    %v355 = vadd.f32 %v354, 1.0
    %v356 = vrcp.pop %v355
    %v357 = vmul.f32 1.0, %v356
    %v359 = vlaneseq
    %v360 = vshrl.u32 %v359, 7
    %v361 = vsub.s32 0, %v360
    %v362 = vrot.slane %v162, %v361
    %v364 = vadd.f32 %v339, %v362
    %v365 = vmul.f32 %v350, %v364
    %v366 = vadd.f32 %v257, %v365
    %v367 = vtanh.pop %v366
    %v368 = vsub.f32 1.0, %v357
    %v369 = vmul.f32 %v368, %v367
    %v370 = vmul.f32 %v357, %v163
    %v371 = vadd.f32 %v369, %v370
    %s372 = scalar_lea.vmem [#allocation5], 4
    %v373 = vld [vmem:[%s372] sm:$0xf]
    %374 = vmatprep.subr.bf16.mxu0 %v114
    %375 = vmatpush1.bf16.msra.mxu0 %v113
    %376 = vmatprep.subr.bf16.mxu0 %v117
    %377 = vmatpush1.bf16.msra.mxu0 %v116
    %378 = vmatprep.subr.bf16.mxu0 %v120
    %379 = vmatpush1.bf16.msra.mxu0 %v119
    %380 = vmatprep.subr.bf16.mxu0 %v123
    %381 = vmatpush1.bf16.msra.mxu0 %v122
    %382 = vmatprep.subr.bf16.mxu0 %v126
    %383 = vmatpush1.bf16.msra.mxu0 %v125
    %384 = vmatprep.subr.bf16.mxu0 %v129
    %385 = vmatpush1.bf16.msra.mxu0 %v128
    %386 = vmatprep.subr.bf16.mxu0 %v132
    %387 = vmatpush1.bf16.msra.mxu0 %v131
    %388 = vmatprep.subr.bf16.mxu0 %v135
    %389 = vmatpush1.bf16.msra.mxu0 %v134
    %390 = vmatprep.subr.bf16.mxu0 0
    %391 = vmatpush1.bf16.msra.mxu0 0
    %392 = vmatprep.subr.bf16.mxu0 0
    %393 = vmatpush1.bf16.msra.mxu0 0
    %394 = vmatprep.subr.bf16.mxu0 0
    %395 = vmatpush1.bf16.msra.mxu0 0
    %396 = vmatprep.subr.bf16.mxu0 0
    %397 = vmatpush1.bf16.msra.mxu0 0
    %398 = vmatprep.subr.bf16.mxu0 0
    %399 = vmatpush1.bf16.msra.mxu0 0
    %400 = vmatprep.subr.bf16.mxu0 0
    %401 = vmatpush1.bf16.msra.mxu0 0
    %402 = vmatprep.subr.bf16.mxu0 0
    %403 = vmatpush1.bf16.msra.mxu0 0
    %404 = vmatprep.subr.bf16.mxu0 0
    %405 = vmatpush1.bf16.msra.mxu0 0
    %406 = vmatprep.mubr.bf16.mxu0 0
    %407 = vmatmul.mubr.bf16.gmra.mrb[0].mxu0 %v373
    %v408 = vpop.f32.mrb[0].mxu0
    %v409 = vadd.f32 %v169, %v408
    %v410 = vpop.f32.mrb[0].mxu0
    %v411 = vadd.f32 %v173, %v410
    %v412 = vpop.f32.mrb[0].mxu0
    %v413 = vpop.f32.mrb[0].mxu0
    %414 = vdwg.mxu0
    %415 = vmatprep.subr.bf16.mxu0 0
    %416 = vmatpush1.bf16.msra.mxu0 %v115
    %417 = vmatprep.subr.bf16.mxu0 0
    %418 = vmatpush1.bf16.msra.mxu0 %v118
    %419 = vmatprep.subr.bf16.mxu0 0
    %420 = vmatpush1.bf16.msra.mxu0 %v121
    %421 = vmatprep.subr.bf16.mxu0 0
    %422 = vmatpush1.bf16.msra.mxu0 %v124
    %423 = vmatprep.subr.bf16.mxu0 0
    %424 = vmatpush1.bf16.msra.mxu0 %v127
    %425 = vmatprep.subr.bf16.mxu0 0
    %426 = vmatpush1.bf16.msra.mxu0 %v130
    %427 = vmatprep.subr.bf16.mxu0 0
    %428 = vmatpush1.bf16.msra.mxu0 %v133
    %429 = vmatprep.subr.bf16.mxu0 0
    %430 = vmatpush1.bf16.msra.mxu0 %v136
    %431 = vmatprep.subr.bf16.mxu0 0
    %432 = vmatpush1.bf16.msra.mxu0 0
    %433 = vmatprep.subr.bf16.mxu0 0
    %434 = vmatpush1.bf16.msra.mxu0 0
    %435 = vmatprep.subr.bf16.mxu0 0
    %436 = vmatpush1.bf16.msra.mxu0 0
    %437 = vmatprep.subr.bf16.mxu0 0
    %438 = vmatpush1.bf16.msra.mxu0 0
    %439 = vmatprep.subr.bf16.mxu0 0
    %440 = vmatpush1.bf16.msra.mxu0 0
    %441 = vmatprep.subr.bf16.mxu0 0
    %442 = vmatpush1.bf16.msra.mxu0 0
    %443 = vmatprep.subr.bf16.mxu0 0
    %444 = vmatpush1.bf16.msra.mxu0 0
    %445 = vmatprep.subr.bf16.mxu0 0
    %446 = vmatpush1.bf16.msra.mxu0 0
    %447 = vmatprep.mubr.bf16.mxu0 0
    %448 = vmatmul.mubr.bf16.gmra.mrb[0].mxu0 %v373
    %v449 = vpop.f32.mrb[0].mxu0
    %v450 = vadd.f32 %v177, %v449
    %v451 = vpop.f32.mrb[0].mxu0
    %v452 = vpop.f32.mrb[0].mxu0
    %v453 = vpop.f32.mrb[0].mxu0
    %454 = vdwg.mxu0
    %v455 = vpack.c.bf16 %v371, %v371
    %456 = vmatprep.subr.bf16.mxu0 %v138
    %457 = vmatpush1.bf16.msra.mxu0 %v137
    %458 = vmatprep.subr.bf16.mxu0 %v141
    %459 = vmatpush1.bf16.msra.mxu0 %v140
    %460 = vmatprep.subr.bf16.mxu0 %v144
    %461 = vmatpush1.bf16.msra.mxu0 %v143
    %462 = vmatprep.subr.bf16.mxu0 %v147
    %463 = vmatpush1.bf16.msra.mxu0 %v146
    %464 = vmatprep.subr.bf16.mxu0 %v150
    %465 = vmatpush1.bf16.msra.mxu0 %v149
    %466 = vmatprep.subr.bf16.mxu0 %v153
    %467 = vmatpush1.bf16.msra.mxu0 %v152
    %468 = vmatprep.subr.bf16.mxu0 %v156
    %469 = vmatpush1.bf16.msra.mxu0 %v155
    %470 = vmatprep.subr.bf16.mxu0 %v159
    %471 = vmatpush1.bf16.msra.mxu0 %v158
    %472 = vmatprep.subr.bf16.mxu0 0
    %473 = vmatpush1.bf16.msra.mxu0 0
    %474 = vmatprep.subr.bf16.mxu0 0
    %475 = vmatpush1.bf16.msra.mxu0 0
    %476 = vmatprep.subr.bf16.mxu0 0
    %477 = vmatpush1.bf16.msra.mxu0 0
    %478 = vmatprep.subr.bf16.mxu0 0
    %479 = vmatpush1.bf16.msra.mxu0 0
    %480 = vmatprep.subr.bf16.mxu0 0
    %481 = vmatpush1.bf16.msra.mxu0 0
    %482 = vmatprep.subr.bf16.mxu0 0
    %483 = vmatpush1.bf16.msra.mxu0 0
    %484 = vmatprep.subr.bf16.mxu0 0
    %485 = vmatpush1.bf16.msra.mxu0 0
    %486 = vmatprep.subr.bf16.mxu0 0
    %487 = vmatpush1.bf16.msra.mxu0 0
    %488 = vmatprep.mubr.bf16.mxu0 0
    %489 = vmatmul.mubr.bf16.gmra.mrb[0].mxu0 %v455
    %v490 = vpop.f32.mrb[0].mxu0
    %v491 = vadd.f32 0.0, %v490
    %v492 = vpop.f32.mrb[0].mxu0
    %v493 = vadd.f32 0.0, %v492
    %v494 = vpop.f32.mrb[0].mxu0
    %v495 = vpop.f32.mrb[0].mxu0
    %496 = vdwg.mxu0
    %497 = vmatprep.subr.bf16.mxu0 0
    %498 = vmatpush1.bf16.msra.mxu0 %v139
    %499 = vmatprep.subr.bf16.mxu0 0
    %500 = vmatpush1.bf16.msra.mxu0 %v142
    %501 = vmatprep.subr.bf16.mxu0 0
    %502 = vmatpush1.bf16.msra.mxu0 %v145
    %503 = vmatprep.subr.bf16.mxu0 0
    %504 = vmatpush1.bf16.msra.mxu0 %v148
    %505 = vmatprep.subr.bf16.mxu0 0
    %506 = vmatpush1.bf16.msra.mxu0 %v151
    %507 = vmatprep.subr.bf16.mxu0 0
    %508 = vmatpush1.bf16.msra.mxu0 %v154
    %509 = vmatprep.subr.bf16.mxu0 0
    %510 = vmatpush1.bf16.msra.mxu0 %v157
    %511 = vmatprep.subr.bf16.mxu0 0
    %512 = vmatpush1.bf16.msra.mxu0 %v160
    %513 = vmatprep.subr.bf16.mxu0 0
    %514 = vmatpush1.bf16.msra.mxu0 0
    %515 = vmatprep.subr.bf16.mxu0 0
    %516 = vmatpush1.bf16.msra.mxu0 0
    %517 = vmatprep.subr.bf16.mxu0 0
    %518 = vmatpush1.bf16.msra.mxu0 0
    %519 = vmatprep.subr.bf16.mxu0 0
    %520 = vmatpush1.bf16.msra.mxu0 0
    %521 = vmatprep.subr.bf16.mxu0 0
    %522 = vmatpush1.bf16.msra.mxu0 0
    %523 = vmatprep.subr.bf16.mxu0 0
    %524 = vmatpush1.bf16.msra.mxu0 0
    %525 = vmatprep.subr.bf16.mxu0 0
    %526 = vmatpush1.bf16.msra.mxu0 0
    %527 = vmatprep.subr.bf16.mxu0 0
    %528 = vmatpush1.bf16.msra.mxu0 0
    %529 = vmatprep.mubr.bf16.mxu0 0
    %530 = vmatmul.mubr.bf16.gmra.mrb[0].mxu0 %v455
    %v531 = vpop.f32.mrb[0].mxu0
    %v532 = vadd.f32 0.0, %v531
    %v533 = vpop.f32.mrb[0].mxu0
    %v534 = vpop.f32.mrb[0].mxu0
    %v535 = vpop.f32.mrb[0].mxu0
    %536 = vdwg.mxu0
    %v537 = vadd.f32 %v409, %v491
    %v538 = vxor.u32 %v537, 2147483648
    %v539 = vmul.f32 %v538, 1.442695
    %v540 = vpow.pop %v539
    %v541 = vadd.f32 %v540, 1.0
    %v542 = vrcp.pop %v541
    %v543 = vmul.f32 1.0, %v542
    %v544 = vadd.f32 %v411, %v493
    %v545 = vxor.u32 %v544, 2147483648
    %v546 = vmul.f32 %v545, 1.442695
    %v547 = vpow.pop %v546
    %v548 = vadd.f32 %v547, 1.0
    %v549 = vrcp.pop %v548
    %v550 = vmul.f32 1.0, %v549
    %v551 = vadd.f32 %v532, %v362
    %v552 = vmul.f32 %v543, %v551
    %v553 = vadd.f32 %v450, %v552
    %v554 = vtanh.pop %v553
    %v555 = vsub.f32 1.0, %v550
    %v556 = vmul.f32 %v555, %v554
    %v557 = vmul.f32 %v550, %v371
    %v558 = vadd.f32 %v556, %v557
    %s559 = scalar_lea.vmem [#allocation5], 8
    %v560 = vld [vmem:[%s559] sm:$0xf]
    %561 = vmatprep.subr.bf16.mxu0 %v114
    %562 = vmatpush1.bf16.msra.mxu0 %v113
    %563 = vmatprep.subr.bf16.mxu0 %v117
    %564 = vmatpush1.bf16.msra.mxu0 %v116
    %565 = vmatprep.subr.bf16.mxu0 %v120
    %566 = vmatpush1.bf16.msra.mxu0 %v119
    %567 = vmatprep.subr.bf16.mxu0 %v123
    %568 = vmatpush1.bf16.msra.mxu0 %v122
    %569 = vmatprep.subr.bf16.mxu0 %v126
    %570 = vmatpush1.bf16.msra.mxu0 %v125
    %571 = vmatprep.subr.bf16.mxu0 %v129
    %572 = vmatpush1.bf16.msra.mxu0 %v128
    %573 = vmatprep.subr.bf16.mxu0 %v132
    %574 = vmatpush1.bf16.msra.mxu0 %v131
    %575 = vmatprep.subr.bf16.mxu0 %v135
    %576 = vmatpush1.bf16.msra.mxu0 %v134
    %577 = vmatprep.subr.bf16.mxu0 0
    %578 = vmatpush1.bf16.msra.mxu0 0
    %579 = vmatprep.subr.bf16.mxu0 0
    %580 = vmatpush1.bf16.msra.mxu0 0
    %581 = vmatprep.subr.bf16.mxu0 0
    %582 = vmatpush1.bf16.msra.mxu0 0
    %583 = vmatprep.subr.bf16.mxu0 0
    %584 = vmatpush1.bf16.msra.mxu0 0
    %585 = vmatprep.subr.bf16.mxu0 0
    %586 = vmatpush1.bf16.msra.mxu0 0
    %587 = vmatprep.subr.bf16.mxu0 0
    %588 = vmatpush1.bf16.msra.mxu0 0
    %589 = vmatprep.subr.bf16.mxu0 0
    %590 = vmatpush1.bf16.msra.mxu0 0
    %591 = vmatprep.subr.bf16.mxu0 0
    %592 = vmatpush1.bf16.msra.mxu0 0
    %593 = vmatprep.mubr.bf16.mxu0 0
    %594 = vmatmul.mubr.bf16.gmra.mrb[0].mxu0 %v560
    %v595 = vpop.f32.mrb[0].mxu0
    %v596 = vadd.f32 %v169, %v595
    %v597 = vpop.f32.mrb[0].mxu0
    %v598 = vadd.f32 %v173, %v597
    %v599 = vpop.f32.mrb[0].mxu0
    %v600 = vpop.f32.mrb[0].mxu0
    %601 = vdwg.mxu0
    %602 = vmatprep.subr.bf16.mxu0 0
    %603 = vmatpush1.bf16.msra.mxu0 %v115
    %604 = vmatprep.subr.bf16.mxu0 0
    %605 = vmatpush1.bf16.msra.mxu0 %v118
    %606 = vmatprep.subr.bf16.mxu0 0
    %607 = vmatpush1.bf16.msra.mxu0 %v121
    %608 = vmatprep.subr.bf16.mxu0 0
    %609 = vmatpush1.bf16.msra.mxu0 %v124
    %610 = vmatprep.subr.bf16.mxu0 0
    %611 = vmatpush1.bf16.msra.mxu0 %v127
    %612 = vmatprep.subr.bf16.mxu0 0
    %613 = vmatpush1.bf16.msra.mxu0 %v130
    %614 = vmatprep.subr.bf16.mxu0 0
    %615 = vmatpush1.bf16.msra.mxu0 %v133
    %616 = vmatprep.subr.bf16.mxu0 0
    %617 = vmatpush1.bf16.msra.mxu0 %v136
    %618 = vmatprep.subr.bf16.mxu0 0
    %619 = vmatpush1.bf16.msra.mxu0 0
    %620 = vmatprep.subr.bf16.mxu0 0
    %621 = vmatpush1.bf16.msra.mxu0 0
    %622 = vmatprep.subr.bf16.mxu0 0
    %623 = vmatpush1.bf16.msra.mxu0 0
    %624 = vmatprep.subr.bf16.mxu0 0
    %625 = vmatpush1.bf16.msra.mxu0 0
    %626 = vmatprep.subr.bf16.mxu0 0
    %627 = vmatpush1.bf16.msra.mxu0 0
    %628 = vmatprep.subr.bf16.mxu0 0
    %629 = vmatpush1.bf16.msra.mxu0 0
    %630 = vmatprep.subr.bf16.mxu0 0
    %631 = vmatpush1.bf16.msra.mxu0 0
    %632 = vmatprep.subr.bf16.mxu0 0
    %633 = vmatpush1.bf16.msra.mxu0 0
    %634 = vmatprep.mubr.bf16.mxu0 0
    %635 = vmatmul.mubr.bf16.gmra.mrb[0].mxu0 %v560
    %v636 = vpop.f32.mrb[0].mxu0
    %v637 = vadd.f32 %v177, %v636
    %v638 = vpop.f32.mrb[0].mxu0
    %v639 = vpop.f32.mrb[0].mxu0
    %v640 = vpop.f32.mrb[0].mxu0
    %641 = vdwg.mxu0
    %v642 = vpack.c.bf16 %v558, %v558
    %643 = vmatprep.subr.bf16.mxu0 %v138
    %644 = vmatpush1.bf16.msra.mxu0 %v137
    %645 = vmatprep.subr.bf16.mxu0 %v141
    %646 = vmatpush1.bf16.msra.mxu0 %v140
    %647 = vmatprep.subr.bf16.mxu0 %v144
    %648 = vmatpush1.bf16.msra.mxu0 %v143
    %649 = vmatprep.subr.bf16.mxu0 %v147
    %650 = vmatpush1.bf16.msra.mxu0 %v146
    %651 = vmatprep.subr.bf16.mxu0 %v150
    %652 = vmatpush1.bf16.msra.mxu0 %v149
    %653 = vmatprep.subr.bf16.mxu0 %v153
    %654 = vmatpush1.bf16.msra.mxu0 %v152
    %655 = vmatprep.subr.bf16.mxu0 %v156
    %656 = vmatpush1.bf16.msra.mxu0 %v155
    %657 = vmatprep.subr.bf16.mxu0 %v159
    %658 = vmatpush1.bf16.msra.mxu0 %v158
    %659 = vmatprep.subr.bf16.mxu0 0
    %660 = vmatpush1.bf16.msra.mxu0 0
    %661 = vmatprep.subr.bf16.mxu0 0
    %662 = vmatpush1.bf16.msra.mxu0 0
    %663 = vmatprep.subr.bf16.mxu0 0
    %664 = vmatpush1.bf16.msra.mxu0 0
    %665 = vmatprep.subr.bf16.mxu0 0
    %666 = vmatpush1.bf16.msra.mxu0 0
    %667 = vmatprep.subr.bf16.mxu0 0
    %668 = vmatpush1.bf16.msra.mxu0 0
    %669 = vmatprep.subr.bf16.mxu0 0
    %670 = vmatpush1.bf16.msra.mxu0 0
    %671 = vmatprep.subr.bf16.mxu0 0
    %672 = vmatpush1.bf16.msra.mxu0 0
    %673 = vmatprep.subr.bf16.mxu0 0
    %674 = vmatpush1.bf16.msra.mxu0 0
    %675 = vmatprep.mubr.bf16.mxu0 0
    %676 = vmatmul.mubr.bf16.gmra.mrb[0].mxu0 %v642
    %v677 = vpop.f32.mrb[0].mxu0
    %v678 = vadd.f32 0.0, %v677
    %v679 = vpop.f32.mrb[0].mxu0
    %v680 = vadd.f32 0.0, %v679
    %v681 = vpop.f32.mrb[0].mxu0
    %v682 = vpop.f32.mrb[0].mxu0
    %683 = vdwg.mxu0
    %684 = vmatprep.subr.bf16.mxu0 0
    %685 = vmatpush1.bf16.msra.mxu0 %v139
    %686 = vmatprep.subr.bf16.mxu0 0
    %687 = vmatpush1.bf16.msra.mxu0 %v142
    %688 = vmatprep.subr.bf16.mxu0 0
    %689 = vmatpush1.bf16.msra.mxu0 %v145
    %690 = vmatprep.subr.bf16.mxu0 0
    %691 = vmatpush1.bf16.msra.mxu0 %v148
    %692 = vmatprep.subr.bf16.mxu0 0
    %693 = vmatpush1.bf16.msra.mxu0 %v151
    %694 = vmatprep.subr.bf16.mxu0 0
    %695 = vmatpush1.bf16.msra.mxu0 %v154
    %696 = vmatprep.subr.bf16.mxu0 0
    %697 = vmatpush1.bf16.msra.mxu0 %v157
    %698 = vmatprep.subr.bf16.mxu0 0
    %699 = vmatpush1.bf16.msra.mxu0 %v160
    %700 = vmatprep.subr.bf16.mxu0 0
    %701 = vmatpush1.bf16.msra.mxu0 0
    %702 = vmatprep.subr.bf16.mxu0 0
    %703 = vmatpush1.bf16.msra.mxu0 0
    %704 = vmatprep.subr.bf16.mxu0 0
    %705 = vmatpush1.bf16.msra.mxu0 0
    %706 = vmatprep.subr.bf16.mxu0 0
    %707 = vmatpush1.bf16.msra.mxu0 0
    %708 = vmatprep.subr.bf16.mxu0 0
    %709 = vmatpush1.bf16.msra.mxu0 0
    %710 = vmatprep.subr.bf16.mxu0 0
    %711 = vmatpush1.bf16.msra.mxu0 0
    %712 = vmatprep.subr.bf16.mxu0 0
    %713 = vmatpush1.bf16.msra.mxu0 0
    %714 = vmatprep.subr.bf16.mxu0 0
    %715 = vmatpush1.bf16.msra.mxu0 0
    %716 = vmatprep.mubr.bf16.mxu0 0
    %717 = vmatmul.mubr.bf16.gmra.mrb[0].mxu0 %v642
    %v718 = vpop.f32.mrb[0].mxu0
    %v719 = vadd.f32 0.0, %v718
    %v720 = vpop.f32.mrb[0].mxu0
    %v721 = vpop.f32.mrb[0].mxu0
    %v722 = vpop.f32.mrb[0].mxu0
    %723 = vdwg.mxu0
    %v724 = vadd.f32 %v596, %v678
    %v725 = vxor.u32 %v724, 2147483648
    %v726 = vmul.f32 %v725, 1.442695
    %v727 = vpow.pop %v726
    %v728 = vadd.f32 %v727, 1.0
    %v729 = vrcp.pop %v728
    %v730 = vmul.f32 1.0, %v729
    %v731 = vadd.f32 %v598, %v680
    %v732 = vxor.u32 %v731, 2147483648
    %v733 = vmul.f32 %v732, 1.442695
    %v734 = vpow.pop %v733
    %v735 = vadd.f32 %v734, 1.0
    %v736 = vrcp.pop %v735
    %v737 = vmul.f32 1.0, %v736
    %v738 = vadd.f32 %v719, %v362
    %v739 = vmul.f32 %v730, %v738
    %v740 = vadd.f32 %v637, %v739
    %v741 = vtanh.pop %v740
    %v742 = vsub.f32 1.0, %v737
    %v743 = vmul.f32 %v742, %v741
    %v744 = vmul.f32 %v737, %v558
    %v745 = vadd.f32 %v743, %v744
    %s746 = scalar_lea.vmem [#allocation5], 12
    %v747 = vld [vmem:[%s746] sm:$0xf]
    %748 = vmatprep.subr.bf16.mxu0 %v114
    %749 = vmatpush1.bf16.msra.mxu0 %v113
    %750 = vmatprep.subr.bf16.mxu0 %v117
    %751 = vmatpush1.bf16.msra.mxu0 %v116
    %752 = vmatprep.subr.bf16.mxu0 %v120
    %753 = vmatpush1.bf16.msra.mxu0 %v119
    %754 = vmatprep.subr.bf16.mxu0 %v123
    %755 = vmatpush1.bf16.msra.mxu0 %v122
    %756 = vmatprep.subr.bf16.mxu0 %v126
    %757 = vmatpush1.bf16.msra.mxu0 %v125
    %758 = vmatprep.subr.bf16.mxu0 %v129
    %759 = vmatpush1.bf16.msra.mxu0 %v128
    %760 = vmatprep.subr.bf16.mxu0 %v132
    %761 = vmatpush1.bf16.msra.mxu0 %v131
    %762 = vmatprep.subr.bf16.mxu0 %v135
    %763 = vmatpush1.bf16.msra.mxu0 %v134
    %764 = vmatprep.subr.bf16.mxu0 0
    %765 = vmatpush1.bf16.msra.mxu0 0
    %766 = vmatprep.subr.bf16.mxu0 0
    %767 = vmatpush1.bf16.msra.mxu0 0
    %768 = vmatprep.subr.bf16.mxu0 0
    %769 = vmatpush1.bf16.msra.mxu0 0
    %770 = vmatprep.subr.bf16.mxu0 0
    %771 = vmatpush1.bf16.msra.mxu0 0
    %772 = vmatprep.subr.bf16.mxu0 0
    %773 = vmatpush1.bf16.msra.mxu0 0
    %774 = vmatprep.subr.bf16.mxu0 0
    %775 = vmatpush1.bf16.msra.mxu0 0
    %776 = vmatprep.subr.bf16.mxu0 0
    %777 = vmatpush1.bf16.msra.mxu0 0
    %778 = vmatprep.subr.bf16.mxu0 0
    %779 = vmatpush1.bf16.msra.mxu0 0
    %780 = vmatprep.mubr.bf16.mxu0 0
    %781 = vmatmul.mubr.bf16.gmra.mrb[0].mxu0 %v747
    %v782 = vpop.f32.mrb[0].mxu0
    %v783 = vadd.f32 %v169, %v782
    %v784 = vpop.f32.mrb[0].mxu0
    %v785 = vadd.f32 %v173, %v784
    %v786 = vpop.f32.mrb[0].mxu0
    %v787 = vpop.f32.mrb[0].mxu0
    %788 = vdwg.mxu0
    %789 = vmatprep.subr.bf16.mxu0 0
    %790 = vmatpush1.bf16.msra.mxu0 %v115
    %791 = vmatprep.subr.bf16.mxu0 0
    %792 = vmatpush1.bf16.msra.mxu0 %v118
    %793 = vmatprep.subr.bf16.mxu0 0
    %794 = vmatpush1.bf16.msra.mxu0 %v121
    %795 = vmatprep.subr.bf16.mxu0 0
    %796 = vmatpush1.bf16.msra.mxu0 %v124
    %797 = vmatprep.subr.bf16.mxu0 0
    %798 = vmatpush1.bf16.msra.mxu0 %v127
    %799 = vmatprep.subr.bf16.mxu0 0
    %800 = vmatpush1.bf16.msra.mxu0 %v130
    %801 = vmatprep.subr.bf16.mxu0 0
    %802 = vmatpush1.bf16.msra.mxu0 %v133
    %803 = vmatprep.subr.bf16.mxu0 0
    %804 = vmatpush1.bf16.msra.mxu0 %v136
    %805 = vmatprep.subr.bf16.mxu0 0
    %806 = vmatpush1.bf16.msra.mxu0 0
    %807 = vmatprep.subr.bf16.mxu0 0
    %808 = vmatpush1.bf16.msra.mxu0 0
    %809 = vmatprep.subr.bf16.mxu0 0
    %810 = vmatpush1.bf16.msra.mxu0 0
    %811 = vmatprep.subr.bf16.mxu0 0
    %812 = vmatpush1.bf16.msra.mxu0 0
    %813 = vmatprep.subr.bf16.mxu0 0
    %814 = vmatpush1.bf16.msra.mxu0 0
    %815 = vmatprep.subr.bf16.mxu0 0
    %816 = vmatpush1.bf16.msra.mxu0 0
    %817 = vmatprep.subr.bf16.mxu0 0
    %818 = vmatpush1.bf16.msra.mxu0 0
    %819 = vmatprep.subr.bf16.mxu0 0
    %820 = vmatpush1.bf16.msra.mxu0 0
    %821 = vmatprep.mubr.bf16.mxu0 0
    %822 = vmatmul.mubr.bf16.gmra.mrb[0].mxu0 %v747
    %v823 = vpop.f32.mrb[0].mxu0
    %v824 = vadd.f32 %v177, %v823
    %v825 = vpop.f32.mrb[0].mxu0
    %v826 = vpop.f32.mrb[0].mxu0
    %v827 = vpop.f32.mrb[0].mxu0
    %828 = vdwg.mxu0
    %v829 = vpack.c.bf16 %v745, %v745
    %830 = vmatprep.subr.bf16.mxu0 %v138
    %831 = vmatpush1.bf16.msra.mxu0 %v137
    %832 = vmatprep.subr.bf16.mxu0 %v141
    %833 = vmatpush1.bf16.msra.mxu0 %v140
    %834 = vmatprep.subr.bf16.mxu0 %v144
    %835 = vmatpush1.bf16.msra.mxu0 %v143
    %836 = vmatprep.subr.bf16.mxu0 %v147
    %837 = vmatpush1.bf16.msra.mxu0 %v146
    %838 = vmatprep.subr.bf16.mxu0 %v150
    %839 = vmatpush1.bf16.msra.mxu0 %v149
    %840 = vmatprep.subr.bf16.mxu0 %v153
    %841 = vmatpush1.bf16.msra.mxu0 %v152
    %842 = vmatprep.subr.bf16.mxu0 %v156
    %843 = vmatpush1.bf16.msra.mxu0 %v155
    %844 = vmatprep.subr.bf16.mxu0 %v159
    %845 = vmatpush1.bf16.msra.mxu0 %v158
    %846 = vmatprep.subr.bf16.mxu0 0
    %847 = vmatpush1.bf16.msra.mxu0 0
    %848 = vmatprep.subr.bf16.mxu0 0
    %849 = vmatpush1.bf16.msra.mxu0 0
    %850 = vmatprep.subr.bf16.mxu0 0
    %851 = vmatpush1.bf16.msra.mxu0 0
    %852 = vmatprep.subr.bf16.mxu0 0
    %853 = vmatpush1.bf16.msra.mxu0 0
    %854 = vmatprep.subr.bf16.mxu0 0
    %855 = vmatpush1.bf16.msra.mxu0 0
    %856 = vmatprep.subr.bf16.mxu0 0
    %857 = vmatpush1.bf16.msra.mxu0 0
    %858 = vmatprep.subr.bf16.mxu0 0
    %859 = vmatpush1.bf16.msra.mxu0 0
    %860 = vmatprep.subr.bf16.mxu0 0
    %861 = vmatpush1.bf16.msra.mxu0 0
    %862 = vmatprep.mubr.bf16.mxu0 0
    %863 = vmatmul.mubr.bf16.gmra.mrb[0].mxu0 %v829
    %v864 = vpop.f32.mrb[0].mxu0
    %v865 = vadd.f32 0.0, %v864
    %v866 = vpop.f32.mrb[0].mxu0
    %v867 = vadd.f32 0.0, %v866
    %v868 = vpop.f32.mrb[0].mxu0
    %v869 = vpop.f32.mrb[0].mxu0
    %870 = vdwg.mxu0
    %871 = vmatprep.subr.bf16.mxu0 0
    %872 = vmatpush1.bf16.msra.mxu0 %v139
    %873 = vmatprep.subr.bf16.mxu0 0
    %874 = vmatpush1.bf16.msra.mxu0 %v142
    %875 = vmatprep.subr.bf16.mxu0 0
    %876 = vmatpush1.bf16.msra.mxu0 %v145
    %877 = vmatprep.subr.bf16.mxu0 0
    %878 = vmatpush1.bf16.msra.mxu0 %v148
    %879 = vmatprep.subr.bf16.mxu0 0
    %880 = vmatpush1.bf16.msra.mxu0 %v151
    %881 = vmatprep.subr.bf16.mxu0 0
    %882 = vmatpush1.bf16.msra.mxu0 %v154
    %883 = vmatprep.subr.bf16.mxu0 0
    %884 = vmatpush1.bf16.msra.mxu0 %v157
    %885 = vmatprep.subr.bf16.mxu0 0
    %886 = vmatpush1.bf16.msra.mxu0 %v160
    %887 = vmatprep.subr.bf16.mxu0 0
    %888 = vmatpush1.bf16.msra.mxu0 0
    %889 = vmatprep.subr.bf16.mxu0 0
    %890 = vmatpush1.bf16.msra.mxu0 0
    %891 = vmatprep.subr.bf16.mxu0 0
    %892 = vmatpush1.bf16.msra.mxu0 0
    %893 = vmatprep.subr.bf16.mxu0 0
    %894 = vmatpush1.bf16.msra.mxu0 0
    %895 = vmatprep.subr.bf16.mxu0 0
    %896 = vmatpush1.bf16.msra.mxu0 0
    %897 = vmatprep.subr.bf16.mxu0 0
    %898 = vmatpush1.bf16.msra.mxu0 0
    %899 = vmatprep.subr.bf16.mxu0 0
    %900 = vmatpush1.bf16.msra.mxu0 0
    %901 = vmatprep.subr.bf16.mxu0 0
    %902 = vmatpush1.bf16.msra.mxu0 0
    %903 = vmatprep.mubr.bf16.mxu0 0
    %904 = vmatmul.mubr.bf16.gmra.mrb[0].mxu0 %v829
    %v905 = vpop.f32.mrb[0].mxu0
    %v906 = vadd.f32 0.0, %v905
    %v907 = vpop.f32.mrb[0].mxu0
    %v908 = vpop.f32.mrb[0].mxu0
    %v909 = vpop.f32.mrb[0].mxu0
    %910 = vdwg.mxu0
    %v911 = vadd.f32 %v783, %v865
    %v912 = vxor.u32 %v911, 2147483648
    %v913 = vmul.f32 %v912, 1.442695
    %v914 = vpow.pop %v913
    %v915 = vadd.f32 %v914, 1.0
    %v916 = vrcp.pop %v915
    %v917 = vmul.f32 1.0, %v916
    %v918 = vadd.f32 %v785, %v867
    %v919 = vxor.u32 %v918, 2147483648
    %v920 = vmul.f32 %v919, 1.442695
    %v921 = vpow.pop %v920
    %v922 = vadd.f32 %v921, 1.0
    %v923 = vrcp.pop %v922
    %v924 = vmul.f32 1.0, %v923
    %v925 = vadd.f32 %v906, %v362
    %v926 = vmul.f32 %v917, %v925
    %v927 = vadd.f32 %v824, %v926
    %v928 = vtanh.pop %v927
    %v929 = vsub.f32 1.0, %v924
    %v930 = vmul.f32 %v929, %v928
    %v931 = vmul.f32 %v924, %v745
    %v932 = vadd.f32 %v930, %v931
    %s933 = scalar_lea.vmem [#allocation5], 16
    %v934 = vld [vmem:[%s933] sm:$0xf]
    %935 = vmatprep.subr.bf16.mxu0 %v114
    %936 = vmatpush1.bf16.msra.mxu0 %v113
    %937 = vmatprep.subr.bf16.mxu0 %v117
    %938 = vmatpush1.bf16.msra.mxu0 %v116
    %939 = vmatprep.subr.bf16.mxu0 %v120
    %940 = vmatpush1.bf16.msra.mxu0 %v119
    %941 = vmatprep.subr.bf16.mxu0 %v123
    %942 = vmatpush1.bf16.msra.mxu0 %v122
    %943 = vmatprep.subr.bf16.mxu0 %v126
    %944 = vmatpush1.bf16.msra.mxu0 %v125
    %945 = vmatprep.subr.bf16.mxu0 %v129
    %946 = vmatpush1.bf16.msra.mxu0 %v128
    %947 = vmatprep.subr.bf16.mxu0 %v132
    %948 = vmatpush1.bf16.msra.mxu0 %v131
    %949 = vmatprep.subr.bf16.mxu0 %v135
    %950 = vmatpush1.bf16.msra.mxu0 %v134
    %951 = vmatprep.subr.bf16.mxu0 0
    %952 = vmatpush1.bf16.msra.mxu0 0
    %953 = vmatprep.subr.bf16.mxu0 0
    %954 = vmatpush1.bf16.msra.mxu0 0
    %955 = vmatprep.subr.bf16.mxu0 0
    %956 = vmatpush1.bf16.msra.mxu0 0
    %957 = vmatprep.subr.bf16.mxu0 0
    %958 = vmatpush1.bf16.msra.mxu0 0
    %959 = vmatprep.subr.bf16.mxu0 0
    %960 = vmatpush1.bf16.msra.mxu0 0
    %961 = vmatprep.subr.bf16.mxu0 0
    %962 = vmatpush1.bf16.msra.mxu0 0
    %963 = vmatprep.subr.bf16.mxu0 0
    %964 = vmatpush1.bf16.msra.mxu0 0
    %965 = vmatprep.subr.bf16.mxu0 0
    %966 = vmatpush1.bf16.msra.mxu0 0
    %967 = vmatprep.mubr.bf16.mxu0 0
    %968 = vmatmul.mubr.bf16.gmra.mrb[0].mxu0 %v934
    %v969 = vpop.f32.mrb[0].mxu0
    %v970 = vadd.f32 %v169, %v969
    %v971 = vpop.f32.mrb[0].mxu0
    %v972 = vadd.f32 %v173, %v971
    %v973 = vpop.f32.mrb[0].mxu0
    %v974 = vpop.f32.mrb[0].mxu0
    %975 = vdwg.mxu0
    %976 = vmatprep.subr.bf16.mxu0 0
    %977 = vmatpush1.bf16.msra.mxu0 %v115
    %978 = vmatprep.subr.bf16.mxu0 0
    %979 = vmatpush1.bf16.msra.mxu0 %v118
    %980 = vmatprep.subr.bf16.mxu0 0
    %981 = vmatpush1.bf16.msra.mxu0 %v121
    %982 = vmatprep.subr.bf16.mxu0 0
    %983 = vmatpush1.bf16.msra.mxu0 %v124
    %984 = vmatprep.subr.bf16.mxu0 0
    %985 = vmatpush1.bf16.msra.mxu0 %v127
    %986 = vmatprep.subr.bf16.mxu0 0
    %987 = vmatpush1.bf16.msra.mxu0 %v130
    %988 = vmatprep.subr.bf16.mxu0 0
    %989 = vmatpush1.bf16.msra.mxu0 %v133
    %990 = vmatprep.subr.bf16.mxu0 0
    %991 = vmatpush1.bf16.msra.mxu0 %v136
    %992 = vmatprep.subr.bf16.mxu0 0
    %993 = vmatpush1.bf16.msra.mxu0 0
    %994 = vmatprep.subr.bf16.mxu0 0
    %995 = vmatpush1.bf16.msra.mxu0 0
    %996 = vmatprep.subr.bf16.mxu0 0
    %997 = vmatpush1.bf16.msra.mxu0 0
    %998 = vmatprep.subr.bf16.mxu0 0
    %999 = vmatpush1.bf16.msra.mxu0 0
    %1000 = vmatprep.subr.bf16.mxu0 0
    %1001 = vmatpush1.bf16.msra.mxu0 0
    %1002 = vmatprep.subr.bf16.mxu0 0
    %1003 = vmatpush1.bf16.msra.mxu0 0
    %1004 = vmatprep.subr.bf16.mxu0 0
    %1005 = vmatpush1.bf16.msra.mxu0 0
    %1006 = vmatprep.subr.bf16.mxu0 0
    %1007 = vmatpush1.bf16.msra.mxu0 0
    %1008 = vmatprep.mubr.bf16.mxu0 0
    %1009 = vmatmul.mubr.bf16.gmra.mrb[0].mxu0 %v934
    %v1010 = vpop.f32.mrb[0].mxu0
    %v1011 = vadd.f32 %v177, %v1010
    %v1012 = vpop.f32.mrb[0].mxu0
    %v1013 = vpop.f32.mrb[0].mxu0
    %v1014 = vpop.f32.mrb[0].mxu0
    %1015 = vdwg.mxu0
    %v1016 = vpack.c.bf16 %v932, %v932
    %1017 = vmatprep.subr.bf16.mxu0 %v138
    %1018 = vmatpush1.bf16.msra.mxu0 %v137
    %1019 = vmatprep.subr.bf16.mxu0 %v141
    %1020 = vmatpush1.bf16.msra.mxu0 %v140
    %1021 = vmatprep.subr.bf16.mxu0 %v144
    %1022 = vmatpush1.bf16.msra.mxu0 %v143
    %1023 = vmatprep.subr.bf16.mxu0 %v147
    %1024 = vmatpush1.bf16.msra.mxu0 %v146
    %1025 = vmatprep.subr.bf16.mxu0 %v150
    %1026 = vmatpush1.bf16.msra.mxu0 %v149
    %1027 = vmatprep.subr.bf16.mxu0 %v153
    %1028 = vmatpush1.bf16.msra.mxu0 %v152
    %1029 = vmatprep.subr.bf16.mxu0 %v156
    %1030 = vmatpush1.bf16.msra.mxu0 %v155
    %1031 = vmatprep.subr.bf16.mxu0 %v159
    %1032 = vmatpush1.bf16.msra.mxu0 %v158
    %1033 = vmatprep.subr.bf16.mxu0 0
    %1034 = vmatpush1.bf16.msra.mxu0 0
    %1035 = vmatprep.subr.bf16.mxu0 0
    %1036 = vmatpush1.bf16.msra.mxu0 0
    %1037 = vmatprep.subr.bf16.mxu0 0
    %1038 = vmatpush1.bf16.msra.mxu0 0
    %1039 = vmatprep.subr.bf16.mxu0 0
    %1040 = vmatpush1.bf16.msra.mxu0 0
    %1041 = vmatprep.subr.bf16.mxu0 0
    %1042 = vmatpush1.bf16.msra.mxu0 0
    %1043 = vmatprep.subr.bf16.mxu0 0
    %1044 = vmatpush1.bf16.msra.mxu0 0
    %1045 = vmatprep.subr.bf16.mxu0 0
    %1046 = vmatpush1.bf16.msra.mxu0 0
    %1047 = vmatprep.subr.bf16.mxu0 0
    %1048 = vmatpush1.bf16.msra.mxu0 0
    %1049 = vmatprep.mubr.bf16.mxu0 0
    %1050 = vmatmul.mubr.bf16.gmra.mrb[0].mxu0 %v1016
    %v1051 = vpop.f32.mrb[0].mxu0
    %v1052 = vadd.f32 0.0, %v1051
    %v1053 = vpop.f32.mrb[0].mxu0
    %v1054 = vadd.f32 0.0, %v1053
    %v1055 = vpop.f32.mrb[0].mxu0
    %v1056 = vpop.f32.mrb[0].mxu0
    %1057 = vdwg.mxu0
    %1058 = vmatprep.subr.bf16.mxu0 0
    %1059 = vmatpush1.bf16.msra.mxu0 %v139
    %1060 = vmatprep.subr.bf16.mxu0 0
    %1061 = vmatpush1.bf16.msra.mxu0 %v142
    %1062 = vmatprep.subr.bf16.mxu0 0
    %1063 = vmatpush1.bf16.msra.mxu0 %v145
    %1064 = vmatprep.subr.bf16.mxu0 0
    %1065 = vmatpush1.bf16.msra.mxu0 %v148
    %1066 = vmatprep.subr.bf16.mxu0 0
    %1067 = vmatpush1.bf16.msra.mxu0 %v151
    %1068 = vmatprep.subr.bf16.mxu0 0
    %1069 = vmatpush1.bf16.msra.mxu0 %v154
    %1070 = vmatprep.subr.bf16.mxu0 0
    %1071 = vmatpush1.bf16.msra.mxu0 %v157
    %1072 = vmatprep.subr.bf16.mxu0 0
    %1073 = vmatpush1.bf16.msra.mxu0 %v160
    %1074 = vmatprep.subr.bf16.mxu0 0
    %1075 = vmatpush1.bf16.msra.mxu0 0
    %1076 = vmatprep.subr.bf16.mxu0 0
    %1077 = vmatpush1.bf16.msra.mxu0 0
    %1078 = vmatprep.subr.bf16.mxu0 0
    %1079 = vmatpush1.bf16.msra.mxu0 0
    %1080 = vmatprep.subr.bf16.mxu0 0
    %1081 = vmatpush1.bf16.msra.mxu0 0
    %1082 = vmatprep.subr.bf16.mxu0 0
    %1083 = vmatpush1.bf16.msra.mxu0 0
    %1084 = vmatprep.subr.bf16.mxu0 0
    %1085 = vmatpush1.bf16.msra.mxu0 0
    %1086 = vmatprep.subr.bf16.mxu0 0
    %1087 = vmatpush1.bf16.msra.mxu0 0
    %1088 = vmatprep.subr.bf16.mxu0 0
    %1089 = vmatpush1.bf16.msra.mxu0 0
    %1090 = vmatprep.mubr.bf16.mxu0 0
    %1091 = vmatmul.mubr.bf16.gmra.mrb[0].mxu0 %v1016
    %v1092 = vpop.f32.mrb[0].mxu0
    %v1093 = vadd.f32 0.0, %v1092
    %v1094 = vpop.f32.mrb[0].mxu0
    %v1095 = vpop.f32.mrb[0].mxu0
    %v1096 = vpop.f32.mrb[0].mxu0
    %1097 = vdwg.mxu0
    %v1098 = vadd.f32 %v970, %v1052
    %v1099 = vxor.u32 %v1098, 2147483648
    %v1100 = vmul.f32 %v1099, 1.442695
    %v1101 = vpow.pop %v1100
    %v1102 = vadd.f32 %v1101, 1.0
    %v1103 = vrcp.pop %v1102
    %v1104 = vmul.f32 1.0, %v1103
    %v1105 = vadd.f32 %v972, %v1054
    %v1106 = vxor.u32 %v1105, 2147483648
    %v1107 = vmul.f32 %v1106, 1.442695
    %v1108 = vpow.pop %v1107
    %v1109 = vadd.f32 %v1108, 1.0
    %v1110 = vrcp.pop %v1109
    %v1111 = vmul.f32 1.0, %v1110
    %v1112 = vadd.f32 %v1093, %v362
    %v1113 = vmul.f32 %v1104, %v1112
    %v1114 = vadd.f32 %v1011, %v1113
    %v1115 = vtanh.pop %v1114
    %v1116 = vsub.f32 1.0, %v1111
    %v1117 = vmul.f32 %v1116, %v1115
    %v1118 = vmul.f32 %v1111, %v932
    %v1119 = vadd.f32 %v1117, %v1118
    %s1120 = scalar_lea.vmem [#allocation5], 20
    %v1121 = vld [vmem:[%s1120] sm:$0xf]
    %1122 = vmatprep.subr.bf16.mxu0 %v114
    %1123 = vmatpush1.bf16.msra.mxu0 %v113
    %1124 = vmatprep.subr.bf16.mxu0 %v117
    %1125 = vmatpush1.bf16.msra.mxu0 %v116
    %1126 = vmatprep.subr.bf16.mxu0 %v120
    %1127 = vmatpush1.bf16.msra.mxu0 %v119
    %1128 = vmatprep.subr.bf16.mxu0 %v123
    %1129 = vmatpush1.bf16.msra.mxu0 %v122
    %1130 = vmatprep.subr.bf16.mxu0 %v126
    %1131 = vmatpush1.bf16.msra.mxu0 %v125
    %1132 = vmatprep.subr.bf16.mxu0 %v129
    %1133 = vmatpush1.bf16.msra.mxu0 %v128
    %1134 = vmatprep.subr.bf16.mxu0 %v132
    %1135 = vmatpush1.bf16.msra.mxu0 %v131
    %1136 = vmatprep.subr.bf16.mxu0 %v135
    %1137 = vmatpush1.bf16.msra.mxu0 %v134
    %1138 = vmatprep.subr.bf16.mxu0 0
    %1139 = vmatpush1.bf16.msra.mxu0 0
    %1140 = vmatprep.subr.bf16.mxu0 0
    %1141 = vmatpush1.bf16.msra.mxu0 0
    %1142 = vmatprep.subr.bf16.mxu0 0
    %1143 = vmatpush1.bf16.msra.mxu0 0
    %1144 = vmatprep.subr.bf16.mxu0 0
    %1145 = vmatpush1.bf16.msra.mxu0 0
    %1146 = vmatprep.subr.bf16.mxu0 0
    %1147 = vmatpush1.bf16.msra.mxu0 0
    %1148 = vmatprep.subr.bf16.mxu0 0
    %1149 = vmatpush1.bf16.msra.mxu0 0
    %1150 = vmatprep.subr.bf16.mxu0 0
    %1151 = vmatpush1.bf16.msra.mxu0 0
    %1152 = vmatprep.subr.bf16.mxu0 0
    %1153 = vmatpush1.bf16.msra.mxu0 0
    %1154 = vmatprep.mubr.bf16.mxu0 0
    %1155 = vmatmul.mubr.bf16.gmra.mrb[0].mxu0 %v1121
    %v1156 = vpop.f32.mrb[0].mxu0
    %v1157 = vadd.f32 %v169, %v1156
    %v1158 = vpop.f32.mrb[0].mxu0
    %v1159 = vadd.f32 %v173, %v1158
    %v1160 = vpop.f32.mrb[0].mxu0
    %v1161 = vpop.f32.mrb[0].mxu0
    %1162 = vdwg.mxu0
    %1163 = vmatprep.subr.bf16.mxu0 0
    %1164 = vmatpush1.bf16.msra.mxu0 %v115
    %1165 = vmatprep.subr.bf16.mxu0 0
    %1166 = vmatpush1.bf16.msra.mxu0 %v118
    %1167 = vmatprep.subr.bf16.mxu0 0
    %1168 = vmatpush1.bf16.msra.mxu0 %v121
    %1169 = vmatprep.subr.bf16.mxu0 0
    %1170 = vmatpush1.bf16.msra.mxu0 %v124
    %1171 = vmatprep.subr.bf16.mxu0 0
    %1172 = vmatpush1.bf16.msra.mxu0 %v127
    %1173 = vmatprep.subr.bf16.mxu0 0
    %1174 = vmatpush1.bf16.msra.mxu0 %v130
    %1175 = vmatprep.subr.bf16.mxu0 0
    %1176 = vmatpush1.bf16.msra.mxu0 %v133
    %1177 = vmatprep.subr.bf16.mxu0 0
    %1178 = vmatpush1.bf16.msra.mxu0 %v136
    %1179 = vmatprep.subr.bf16.mxu0 0
    %1180 = vmatpush1.bf16.msra.mxu0 0
    %1181 = vmatprep.subr.bf16.mxu0 0
    %1182 = vmatpush1.bf16.msra.mxu0 0
    %1183 = vmatprep.subr.bf16.mxu0 0
    %1184 = vmatpush1.bf16.msra.mxu0 0
    %1185 = vmatprep.subr.bf16.mxu0 0
    %1186 = vmatpush1.bf16.msra.mxu0 0
    %1187 = vmatprep.subr.bf16.mxu0 0
    %1188 = vmatpush1.bf16.msra.mxu0 0
    %1189 = vmatprep.subr.bf16.mxu0 0
    %1190 = vmatpush1.bf16.msra.mxu0 0
    %1191 = vmatprep.subr.bf16.mxu0 0
    %1192 = vmatpush1.bf16.msra.mxu0 0
    %1193 = vmatprep.subr.bf16.mxu0 0
    %1194 = vmatpush1.bf16.msra.mxu0 0
    %1195 = vmatprep.mubr.bf16.mxu0 0
    %1196 = vmatmul.mubr.bf16.gmra.mrb[0].mxu0 %v1121
    %v1197 = vpop.f32.mrb[0].mxu0
    %v1198 = vadd.f32 %v177, %v1197
    %v1199 = vpop.f32.mrb[0].mxu0
    %v1200 = vpop.f32.mrb[0].mxu0
    %v1201 = vpop.f32.mrb[0].mxu0
    %1202 = vdwg.mxu0
    %v1203 = vpack.c.bf16 %v1119, %v1119
    %1204 = vmatprep.subr.bf16.mxu0 %v138
    %1205 = vmatpush1.bf16.msra.mxu0 %v137
    %1206 = vmatprep.subr.bf16.mxu0 %v141
    %1207 = vmatpush1.bf16.msra.mxu0 %v140
    %1208 = vmatprep.subr.bf16.mxu0 %v144
    %1209 = vmatpush1.bf16.msra.mxu0 %v143
    %1210 = vmatprep.subr.bf16.mxu0 %v147
    %1211 = vmatpush1.bf16.msra.mxu0 %v146
    %1212 = vmatprep.subr.bf16.mxu0 %v150
    %1213 = vmatpush1.bf16.msra.mxu0 %v149
    %1214 = vmatprep.subr.bf16.mxu0 %v153
    %1215 = vmatpush1.bf16.msra.mxu0 %v152
    %1216 = vmatprep.subr.bf16.mxu0 %v156
    %1217 = vmatpush1.bf16.msra.mxu0 %v155
    %1218 = vmatprep.subr.bf16.mxu0 %v159
    %1219 = vmatpush1.bf16.msra.mxu0 %v158
    %1220 = vmatprep.subr.bf16.mxu0 0
    %1221 = vmatpush1.bf16.msra.mxu0 0
    %1222 = vmatprep.subr.bf16.mxu0 0
    %1223 = vmatpush1.bf16.msra.mxu0 0
    %1224 = vmatprep.subr.bf16.mxu0 0
    %1225 = vmatpush1.bf16.msra.mxu0 0
    %1226 = vmatprep.subr.bf16.mxu0 0
    %1227 = vmatpush1.bf16.msra.mxu0 0
    %1228 = vmatprep.subr.bf16.mxu0 0
    %1229 = vmatpush1.bf16.msra.mxu0 0
    %1230 = vmatprep.subr.bf16.mxu0 0
    %1231 = vmatpush1.bf16.msra.mxu0 0
    %1232 = vmatprep.subr.bf16.mxu0 0
    %1233 = vmatpush1.bf16.msra.mxu0 0
    %1234 = vmatprep.subr.bf16.mxu0 0
    %1235 = vmatpush1.bf16.msra.mxu0 0
    %1236 = vmatprep.mubr.bf16.mxu0 0
    %1237 = vmatmul.mubr.bf16.gmra.mrb[0].mxu0 %v1203
    %v1238 = vpop.f32.mrb[0].mxu0
    %v1239 = vadd.f32 0.0, %v1238
    %v1240 = vpop.f32.mrb[0].mxu0
    %v1241 = vadd.f32 0.0, %v1240
    %v1242 = vpop.f32.mrb[0].mxu0
    %v1243 = vpop.f32.mrb[0].mxu0
    %1244 = vdwg.mxu0
    %1245 = vmatprep.subr.bf16.mxu0 0
    %1246 = vmatpush1.bf16.msra.mxu0 %v139
    %1247 = vmatprep.subr.bf16.mxu0 0
    %1248 = vmatpush1.bf16.msra.mxu0 %v142
    %1249 = vmatprep.subr.bf16.mxu0 0
    %1250 = vmatpush1.bf16.msra.mxu0 %v145
    %1251 = vmatprep.subr.bf16.mxu0 0
    %1252 = vmatpush1.bf16.msra.mxu0 %v148
    %1253 = vmatprep.subr.bf16.mxu0 0
    %1254 = vmatpush1.bf16.msra.mxu0 %v151
    %1255 = vmatprep.subr.bf16.mxu0 0
    %1256 = vmatpush1.bf16.msra.mxu0 %v154
    %1257 = vmatprep.subr.bf16.mxu0 0
    %1258 = vmatpush1.bf16.msra.mxu0 %v157
    %1259 = vmatprep.subr.bf16.mxu0 0
    %1260 = vmatpush1.bf16.msra.mxu0 %v160
    %1261 = vmatprep.subr.bf16.mxu0 0
    %1262 = vmatpush1.bf16.msra.mxu0 0
    %1263 = vmatprep.subr.bf16.mxu0 0
    %1264 = vmatpush1.bf16.msra.mxu0 0
    %1265 = vmatprep.subr.bf16.mxu0 0
    %1266 = vmatpush1.bf16.msra.mxu0 0
    %1267 = vmatprep.subr.bf16.mxu0 0
    %1268 = vmatpush1.bf16.msra.mxu0 0
    %1269 = vmatprep.subr.bf16.mxu0 0
    %1270 = vmatpush1.bf16.msra.mxu0 0
    %1271 = vmatprep.subr.bf16.mxu0 0
    %1272 = vmatpush1.bf16.msra.mxu0 0
    %1273 = vmatprep.subr.bf16.mxu0 0
    %1274 = vmatpush1.bf16.msra.mxu0 0
    %1275 = vmatprep.subr.bf16.mxu0 0
    %1276 = vmatpush1.bf16.msra.mxu0 0
    %1277 = vmatprep.mubr.bf16.mxu0 0
    %1278 = vmatmul.mubr.bf16.gmra.mrb[0].mxu0 %v1203
    %v1279 = vpop.f32.mrb[0].mxu0
    %v1280 = vadd.f32 0.0, %v1279
    %v1281 = vpop.f32.mrb[0].mxu0
    %v1282 = vpop.f32.mrb[0].mxu0
    %v1283 = vpop.f32.mrb[0].mxu0
    %1284 = vdwg.mxu0
    %v1285 = vadd.f32 %v1157, %v1239
    %v1286 = vxor.u32 %v1285, 2147483648
    %v1287 = vmul.f32 %v1286, 1.442695
    %v1288 = vpow.pop %v1287
    %v1289 = vadd.f32 %v1288, 1.0
    %v1290 = vrcp.pop %v1289
    %v1291 = vmul.f32 1.0, %v1290
    %v1292 = vadd.f32 %v1159, %v1241
    %v1293 = vxor.u32 %v1292, 2147483648
    %v1294 = vmul.f32 %v1293, 1.442695
    %v1295 = vpow.pop %v1294
    %v1296 = vadd.f32 %v1295, 1.0
    %v1297 = vrcp.pop %v1296
    %v1298 = vmul.f32 1.0, %v1297
    %v1299 = vadd.f32 %v1280, %v362
    %v1300 = vmul.f32 %v1291, %v1299
    %v1301 = vadd.f32 %v1198, %v1300
    %v1302 = vtanh.pop %v1301
    %v1303 = vsub.f32 1.0, %v1298
    %v1304 = vmul.f32 %v1303, %v1302
    %v1305 = vmul.f32 %v1298, %v1119
    %v1306 = vadd.f32 %v1304, %v1305
    %s1307 = scalar_lea.vmem [#allocation5], 24
    %v1308 = vld [vmem:[%s1307] sm:$0xf]
    %1309 = vmatprep.subr.bf16.mxu0 %v114
    %1310 = vmatpush1.bf16.msra.mxu0 %v113
    %1311 = vmatprep.subr.bf16.mxu0 %v117
    %1312 = vmatpush1.bf16.msra.mxu0 %v116
    %1313 = vmatprep.subr.bf16.mxu0 %v120
    %1314 = vmatpush1.bf16.msra.mxu0 %v119
    %1315 = vmatprep.subr.bf16.mxu0 %v123
    %1316 = vmatpush1.bf16.msra.mxu0 %v122
    %1317 = vmatprep.subr.bf16.mxu0 %v126
    %1318 = vmatpush1.bf16.msra.mxu0 %v125
    %1319 = vmatprep.subr.bf16.mxu0 %v129
    %1320 = vmatpush1.bf16.msra.mxu0 %v128
    %1321 = vmatprep.subr.bf16.mxu0 %v132
    %1322 = vmatpush1.bf16.msra.mxu0 %v131
    %1323 = vmatprep.subr.bf16.mxu0 %v135
    %1324 = vmatpush1.bf16.msra.mxu0 %v134
    %1325 = vmatprep.subr.bf16.mxu0 0
    %1326 = vmatpush1.bf16.msra.mxu0 0
    %1327 = vmatprep.subr.bf16.mxu0 0
    %1328 = vmatpush1.bf16.msra.mxu0 0
    %1329 = vmatprep.subr.bf16.mxu0 0
    %1330 = vmatpush1.bf16.msra.mxu0 0
    %1331 = vmatprep.subr.bf16.mxu0 0
    %1332 = vmatpush1.bf16.msra.mxu0 0
    %1333 = vmatprep.subr.bf16.mxu0 0
    %1334 = vmatpush1.bf16.msra.mxu0 0
    %1335 = vmatprep.subr.bf16.mxu0 0
    %1336 = vmatpush1.bf16.msra.mxu0 0
    %1337 = vmatprep.subr.bf16.mxu0 0
    %1338 = vmatpush1.bf16.msra.mxu0 0
    %1339 = vmatprep.subr.bf16.mxu0 0
    %1340 = vmatpush1.bf16.msra.mxu0 0
    %1341 = vmatprep.mubr.bf16.mxu0 0
    %1342 = vmatmul.mubr.bf16.gmra.mrb[0].mxu0 %v1308
    %v1343 = vpop.f32.mrb[0].mxu0
    %v1344 = vadd.f32 %v169, %v1343
    %v1345 = vpop.f32.mrb[0].mxu0
    %v1346 = vadd.f32 %v173, %v1345
    %v1347 = vpop.f32.mrb[0].mxu0
    %v1348 = vpop.f32.mrb[0].mxu0
    %1349 = vdwg.mxu0
    %1350 = vmatprep.subr.bf16.mxu0 0
    %1351 = vmatpush1.bf16.msra.mxu0 %v115
    %1352 = vmatprep.subr.bf16.mxu0 0
    %1353 = vmatpush1.bf16.msra.mxu0 %v118
    %1354 = vmatprep.subr.bf16.mxu0 0
    %1355 = vmatpush1.bf16.msra.mxu0 %v121
    %1356 = vmatprep.subr.bf16.mxu0 0
    %1357 = vmatpush1.bf16.msra.mxu0 %v124
    %1358 = vmatprep.subr.bf16.mxu0 0
    %1359 = vmatpush1.bf16.msra.mxu0 %v127
    %1360 = vmatprep.subr.bf16.mxu0 0
    %1361 = vmatpush1.bf16.msra.mxu0 %v130
    %1362 = vmatprep.subr.bf16.mxu0 0
    %1363 = vmatpush1.bf16.msra.mxu0 %v133
    %1364 = vmatprep.subr.bf16.mxu0 0
    %1365 = vmatpush1.bf16.msra.mxu0 %v136
    %1366 = vmatprep.subr.bf16.mxu0 0
    %1367 = vmatpush1.bf16.msra.mxu0 0
    %1368 = vmatprep.subr.bf16.mxu0 0
    %1369 = vmatpush1.bf16.msra.mxu0 0
    %1370 = vmatprep.subr.bf16.mxu0 0
    %1371 = vmatpush1.bf16.msra.mxu0 0
    %1372 = vmatprep.subr.bf16.mxu0 0
    %1373 = vmatpush1.bf16.msra.mxu0 0
    %1374 = vmatprep.subr.bf16.mxu0 0
    %1375 = vmatpush1.bf16.msra.mxu0 0
    %1376 = vmatprep.subr.bf16.mxu0 0
    %1377 = vmatpush1.bf16.msra.mxu0 0
    %1378 = vmatprep.subr.bf16.mxu0 0
    %1379 = vmatpush1.bf16.msra.mxu0 0
    %1380 = vmatprep.subr.bf16.mxu0 0
    %1381 = vmatpush1.bf16.msra.mxu0 0
    %1382 = vmatprep.mubr.bf16.mxu0 0
    %1383 = vmatmul.mubr.bf16.gmra.mrb[0].mxu0 %v1308
    %v1384 = vpop.f32.mrb[0].mxu0
    %v1385 = vadd.f32 %v177, %v1384
    %v1386 = vpop.f32.mrb[0].mxu0
    %v1387 = vpop.f32.mrb[0].mxu0
    %v1388 = vpop.f32.mrb[0].mxu0
    %1389 = vdwg.mxu0
    %v1390 = vpack.c.bf16 %v1306, %v1306
    %1391 = vmatprep.subr.bf16.mxu0 %v138
    %1392 = vmatpush1.bf16.msra.mxu0 %v137
    %1393 = vmatprep.subr.bf16.mxu0 %v141
    %1394 = vmatpush1.bf16.msra.mxu0 %v140
    %1395 = vmatprep.subr.bf16.mxu0 %v144
    %1396 = vmatpush1.bf16.msra.mxu0 %v143
    %1397 = vmatprep.subr.bf16.mxu0 %v147
    %1398 = vmatpush1.bf16.msra.mxu0 %v146
    %1399 = vmatprep.subr.bf16.mxu0 %v150
    %1400 = vmatpush1.bf16.msra.mxu0 %v149
    %1401 = vmatprep.subr.bf16.mxu0 %v153
    %1402 = vmatpush1.bf16.msra.mxu0 %v152
    %1403 = vmatprep.subr.bf16.mxu0 %v156
    %1404 = vmatpush1.bf16.msra.mxu0 %v155
    %1405 = vmatprep.subr.bf16.mxu0 %v159
    %1406 = vmatpush1.bf16.msra.mxu0 %v158
    %1407 = vmatprep.subr.bf16.mxu0 0
    %1408 = vmatpush1.bf16.msra.mxu0 0
    %1409 = vmatprep.subr.bf16.mxu0 0
    %1410 = vmatpush1.bf16.msra.mxu0 0
    %1411 = vmatprep.subr.bf16.mxu0 0
    %1412 = vmatpush1.bf16.msra.mxu0 0
    %1413 = vmatprep.subr.bf16.mxu0 0
    %1414 = vmatpush1.bf16.msra.mxu0 0
    %1415 = vmatprep.subr.bf16.mxu0 0
    %1416 = vmatpush1.bf16.msra.mxu0 0
    %1417 = vmatprep.subr.bf16.mxu0 0
    %1418 = vmatpush1.bf16.msra.mxu0 0
    %1419 = vmatprep.subr.bf16.mxu0 0
    %1420 = vmatpush1.bf16.msra.mxu0 0
    %1421 = vmatprep.subr.bf16.mxu0 0
    %1422 = vmatpush1.bf16.msra.mxu0 0
    %1423 = vmatprep.mubr.bf16.mxu0 0
    %1424 = vmatmul.mubr.bf16.gmra.mrb[0].mxu0 %v1390
    %v1425 = vpop.f32.mrb[0].mxu0
    %v1426 = vadd.f32 0.0, %v1425
    %v1427 = vpop.f32.mrb[0].mxu0
    %v1428 = vadd.f32 0.0, %v1427
    %v1429 = vpop.f32.mrb[0].mxu0
    %v1430 = vpop.f32.mrb[0].mxu0
    %1431 = vdwg.mxu0
    %1432 = vmatprep.subr.bf16.mxu0 0
    %1433 = vmatpush1.bf16.msra.mxu0 %v139
    %1434 = vmatprep.subr.bf16.mxu0 0
    %1435 = vmatpush1.bf16.msra.mxu0 %v142
    %1436 = vmatprep.subr.bf16.mxu0 0
    %1437 = vmatpush1.bf16.msra.mxu0 %v145
    %1438 = vmatprep.subr.bf16.mxu0 0
    %1439 = vmatpush1.bf16.msra.mxu0 %v148
    %1440 = vmatprep.subr.bf16.mxu0 0
    %1441 = vmatpush1.bf16.msra.mxu0 %v151
    %1442 = vmatprep.subr.bf16.mxu0 0
    %1443 = vmatpush1.bf16.msra.mxu0 %v154
    %1444 = vmatprep.subr.bf16.mxu0 0
    %1445 = vmatpush1.bf16.msra.mxu0 %v157
    %1446 = vmatprep.subr.bf16.mxu0 0
    %1447 = vmatpush1.bf16.msra.mxu0 %v160
    %1448 = vmatprep.subr.bf16.mxu0 0
    %1449 = vmatpush1.bf16.msra.mxu0 0
    %1450 = vmatprep.subr.bf16.mxu0 0
    %1451 = vmatpush1.bf16.msra.mxu0 0
    %1452 = vmatprep.subr.bf16.mxu0 0
    %1453 = vmatpush1.bf16.msra.mxu0 0
    %1454 = vmatprep.subr.bf16.mxu0 0
    %1455 = vmatpush1.bf16.msra.mxu0 0
    %1456 = vmatprep.subr.bf16.mxu0 0
    %1457 = vmatpush1.bf16.msra.mxu0 0
    %1458 = vmatprep.subr.bf16.mxu0 0
    %1459 = vmatpush1.bf16.msra.mxu0 0
    %1460 = vmatprep.subr.bf16.mxu0 0
    %1461 = vmatpush1.bf16.msra.mxu0 0
    %1462 = vmatprep.subr.bf16.mxu0 0
    %1463 = vmatpush1.bf16.msra.mxu0 0
    %1464 = vmatprep.mubr.bf16.mxu0 0
    %1465 = vmatmul.mubr.bf16.gmra.mrb[0].mxu0 %v1390
    %v1466 = vpop.f32.mrb[0].mxu0
    %v1467 = vadd.f32 0.0, %v1466
    %v1468 = vpop.f32.mrb[0].mxu0
    %v1469 = vpop.f32.mrb[0].mxu0
    %v1470 = vpop.f32.mrb[0].mxu0
    %1471 = vdwg.mxu0
    %v1472 = vadd.f32 %v1344, %v1426
    %v1473 = vxor.u32 %v1472, 2147483648
    %v1474 = vmul.f32 %v1473, 1.442695
    %v1475 = vpow.pop %v1474
    %v1476 = vadd.f32 %v1475, 1.0
    %v1477 = vrcp.pop %v1476
    %v1478 = vmul.f32 1.0, %v1477
    %v1479 = vadd.f32 %v1346, %v1428
    %v1480 = vxor.u32 %v1479, 2147483648
    %v1481 = vmul.f32 %v1480, 1.442695
    %v1482 = vpow.pop %v1481
    %v1483 = vadd.f32 %v1482, 1.0
    %v1484 = vrcp.pop %v1483
    %v1485 = vmul.f32 1.0, %v1484
    %v1486 = vadd.f32 %v1467, %v362
    %v1487 = vmul.f32 %v1478, %v1486
    %v1488 = vadd.f32 %v1385, %v1487
    %v1489 = vtanh.pop %v1488
    %v1490 = vsub.f32 1.0, %v1485
    %v1491 = vmul.f32 %v1490, %v1489
    %v1492 = vmul.f32 %v1485, %v1306
    %v1493 = vadd.f32 %v1491, %v1492
    %s1494 = scalar_lea.vmem [#allocation5], 28
    %v1495 = vld [vmem:[%s1494] sm:$0xf]
    %1496 = vmatprep.subr.bf16.mxu0 %v114
    %1497 = vmatpush1.bf16.msra.mxu0 %v113
    %1498 = vmatprep.subr.bf16.mxu0 %v117
    %1499 = vmatpush1.bf16.msra.mxu0 %v116
    %1500 = vmatprep.subr.bf16.mxu0 %v120
    %1501 = vmatpush1.bf16.msra.mxu0 %v119
    %1502 = vmatprep.subr.bf16.mxu0 %v123
    %1503 = vmatpush1.bf16.msra.mxu0 %v122
    %1504 = vmatprep.subr.bf16.mxu0 %v126
    %1505 = vmatpush1.bf16.msra.mxu0 %v125
    %1506 = vmatprep.subr.bf16.mxu0 %v129
    %1507 = vmatpush1.bf16.msra.mxu0 %v128
    %1508 = vmatprep.subr.bf16.mxu0 %v132
    %1509 = vmatpush1.bf16.msra.mxu0 %v131
    %1510 = vmatprep.subr.bf16.mxu0 %v135
    %1511 = vmatpush1.bf16.msra.mxu0 %v134
    %1512 = vmatprep.subr.bf16.mxu0 0
    %1513 = vmatpush1.bf16.msra.mxu0 0
    %1514 = vmatprep.subr.bf16.mxu0 0
    %1515 = vmatpush1.bf16.msra.mxu0 0
    %1516 = vmatprep.subr.bf16.mxu0 0
    %1517 = vmatpush1.bf16.msra.mxu0 0
    %1518 = vmatprep.subr.bf16.mxu0 0
    %1519 = vmatpush1.bf16.msra.mxu0 0
    %1520 = vmatprep.subr.bf16.mxu0 0
    %1521 = vmatpush1.bf16.msra.mxu0 0
    %1522 = vmatprep.subr.bf16.mxu0 0
    %1523 = vmatpush1.bf16.msra.mxu0 0
    %1524 = vmatprep.subr.bf16.mxu0 0
    %1525 = vmatpush1.bf16.msra.mxu0 0
    %1526 = vmatprep.subr.bf16.mxu0 0
    %1527 = vmatpush1.bf16.msra.mxu0 0
    %1528 = vmatprep.mubr.bf16.mxu0 0
    %1529 = vmatmul.mubr.bf16.gmra.mrb[0].mxu0 %v1495
    %v1530 = vpop.f32.mrb[0].mxu0
    %v1531 = vadd.f32 %v169, %v1530
    %v1532 = vpop.f32.mrb[0].mxu0
    %v1533 = vadd.f32 %v173, %v1532
    %v1534 = vpop.f32.mrb[0].mxu0
    %v1535 = vpop.f32.mrb[0].mxu0
    %1536 = vdwg.mxu0
    %1537 = vmatprep.subr.bf16.mxu0 0
    %1538 = vmatpush1.bf16.msra.mxu0 %v115
    %1539 = vmatprep.subr.bf16.mxu0 0
    %1540 = vmatpush1.bf16.msra.mxu0 %v118
    %1541 = vmatprep.subr.bf16.mxu0 0
    %1542 = vmatpush1.bf16.msra.mxu0 %v121
    %1543 = vmatprep.subr.bf16.mxu0 0
    %1544 = vmatpush1.bf16.msra.mxu0 %v124
    %1545 = vmatprep.subr.bf16.mxu0 0
    %1546 = vmatpush1.bf16.msra.mxu0 %v127
    %1547 = vmatprep.subr.bf16.mxu0 0
    %1548 = vmatpush1.bf16.msra.mxu0 %v130
    %1549 = vmatprep.subr.bf16.mxu0 0
    %1550 = vmatpush1.bf16.msra.mxu0 %v133
    %1551 = vmatprep.subr.bf16.mxu0 0
    %1552 = vmatpush1.bf16.msra.mxu0 %v136
    %1553 = vmatprep.subr.bf16.mxu0 0
    %1554 = vmatpush1.bf16.msra.mxu0 0
    %1555 = vmatprep.subr.bf16.mxu0 0
    %1556 = vmatpush1.bf16.msra.mxu0 0
    %1557 = vmatprep.subr.bf16.mxu0 0
    %1558 = vmatpush1.bf16.msra.mxu0 0
    %1559 = vmatprep.subr.bf16.mxu0 0
    %1560 = vmatpush1.bf16.msra.mxu0 0
    %1561 = vmatprep.subr.bf16.mxu0 0
    %1562 = vmatpush1.bf16.msra.mxu0 0
    %1563 = vmatprep.subr.bf16.mxu0 0
    %1564 = vmatpush1.bf16.msra.mxu0 0
    %1565 = vmatprep.subr.bf16.mxu0 0
    %1566 = vmatpush1.bf16.msra.mxu0 0
    %1567 = vmatprep.subr.bf16.mxu0 0
    %1568 = vmatpush1.bf16.msra.mxu0 0
    %1569 = vmatprep.mubr.bf16.mxu0 0
    %1570 = vmatmul.mubr.bf16.gmra.mrb[0].mxu0 %v1495
    %v1571 = vpop.f32.mrb[0].mxu0
    %v1572 = vadd.f32 %v177, %v1571
    %v1573 = vpop.f32.mrb[0].mxu0
    %v1574 = vpop.f32.mrb[0].mxu0
    %v1575 = vpop.f32.mrb[0].mxu0
    %1576 = vdwg.mxu0
    %v1577 = vpack.c.bf16 %v1493, %v1493
    %1578 = vmatprep.subr.bf16.mxu0 %v138
    %1579 = vmatpush1.bf16.msra.mxu0 %v137
    %1580 = vmatprep.subr.bf16.mxu0 %v141
    %1581 = vmatpush1.bf16.msra.mxu0 %v140
    %1582 = vmatprep.subr.bf16.mxu0 %v144
    %1583 = vmatpush1.bf16.msra.mxu0 %v143
    %1584 = vmatprep.subr.bf16.mxu0 %v147
    %1585 = vmatpush1.bf16.msra.mxu0 %v146
    %1586 = vmatprep.subr.bf16.mxu0 %v150
    %1587 = vmatpush1.bf16.msra.mxu0 %v149
    %1588 = vmatprep.subr.bf16.mxu0 %v153
    %1589 = vmatpush1.bf16.msra.mxu0 %v152
    %1590 = vmatprep.subr.bf16.mxu0 %v156
    %1591 = vmatpush1.bf16.msra.mxu0 %v155
    %1592 = vmatprep.subr.bf16.mxu0 %v159
    %1593 = vmatpush1.bf16.msra.mxu0 %v158
    %1594 = vmatprep.subr.bf16.mxu0 0
    %1595 = vmatpush1.bf16.msra.mxu0 0
    %1596 = vmatprep.subr.bf16.mxu0 0
    %1597 = vmatpush1.bf16.msra.mxu0 0
    %1598 = vmatprep.subr.bf16.mxu0 0
    %1599 = vmatpush1.bf16.msra.mxu0 0
    %1600 = vmatprep.subr.bf16.mxu0 0
    %1601 = vmatpush1.bf16.msra.mxu0 0
    %1602 = vmatprep.subr.bf16.mxu0 0
    %1603 = vmatpush1.bf16.msra.mxu0 0
    %1604 = vmatprep.subr.bf16.mxu0 0
    %1605 = vmatpush1.bf16.msra.mxu0 0
    %1606 = vmatprep.subr.bf16.mxu0 0
    %1607 = vmatpush1.bf16.msra.mxu0 0
    %1608 = vmatprep.subr.bf16.mxu0 0
    %1609 = vmatpush1.bf16.msra.mxu0 0
    %1610 = vmatprep.mubr.bf16.mxu0 0
    %1611 = vmatmul.mubr.bf16.gmra.mrb[0].mxu0 %v1577
    %v1612 = vpop.f32.mrb[0].mxu0
    %v1613 = vadd.f32 0.0, %v1612
    %v1614 = vpop.f32.mrb[0].mxu0
    %v1615 = vadd.f32 0.0, %v1614
    %v1616 = vpop.f32.mrb[0].mxu0
    %v1617 = vpop.f32.mrb[0].mxu0
    %1618 = vdwg.mxu0
    %1619 = vmatprep.subr.bf16.mxu0 0
    %1620 = vmatpush1.bf16.msra.mxu0 %v139
    %1621 = vmatprep.subr.bf16.mxu0 0
    %1622 = vmatpush1.bf16.msra.mxu0 %v142
    %1623 = vmatprep.subr.bf16.mxu0 0
    %1624 = vmatpush1.bf16.msra.mxu0 %v145
    %1625 = vmatprep.subr.bf16.mxu0 0
    %1626 = vmatpush1.bf16.msra.mxu0 %v148
    %1627 = vmatprep.subr.bf16.mxu0 0
    %1628 = vmatpush1.bf16.msra.mxu0 %v151
    %1629 = vmatprep.subr.bf16.mxu0 0
    %1630 = vmatpush1.bf16.msra.mxu0 %v154
    %1631 = vmatprep.subr.bf16.mxu0 0
    %1632 = vmatpush1.bf16.msra.mxu0 %v157
    %1633 = vmatprep.subr.bf16.mxu0 0
    %1634 = vmatpush1.bf16.msra.mxu0 %v160
    %1635 = vmatprep.subr.bf16.mxu0 0
    %1636 = vmatpush1.bf16.msra.mxu0 0
    %1637 = vmatprep.subr.bf16.mxu0 0
    %1638 = vmatpush1.bf16.msra.mxu0 0
    %1639 = vmatprep.subr.bf16.mxu0 0
    %1640 = vmatpush1.bf16.msra.mxu0 0
    %1641 = vmatprep.subr.bf16.mxu0 0
    %1642 = vmatpush1.bf16.msra.mxu0 0
    %1643 = vmatprep.subr.bf16.mxu0 0
    %1644 = vmatpush1.bf16.msra.mxu0 0
    %1645 = vmatprep.subr.bf16.mxu0 0
    %1646 = vmatpush1.bf16.msra.mxu0 0
    %1647 = vmatprep.subr.bf16.mxu0 0
    %1648 = vmatpush1.bf16.msra.mxu0 0
    %1649 = vmatprep.subr.bf16.mxu0 0
    %1650 = vmatpush1.bf16.msra.mxu0 0
    %1651 = vmatprep.mubr.bf16.mxu0 0
    %1652 = vmatmul.mubr.bf16.gmra.mrb[0].mxu0 %v1577
    %v1653 = vpop.f32.mrb[0].mxu0
    %v1654 = vadd.f32 0.0, %v1653
    %v1655 = vpop.f32.mrb[0].mxu0
    %v1656 = vpop.f32.mrb[0].mxu0
    %v1657 = vpop.f32.mrb[0].mxu0
    %1658 = vdwg.mxu0
    %v1659 = vadd.f32 %v1531, %v1613
    %v1660 = vxor.u32 %v1659, 2147483648
    %v1661 = vmul.f32 %v1660, 1.442695
    %v1662 = vpow.pop %v1661
    %v1663 = vadd.f32 %v1662, 1.0
    %v1664 = vrcp.pop %v1663
    %v1665 = vmul.f32 1.0, %v1664
    %v1666 = vadd.f32 %v1533, %v1615
    %v1667 = vxor.u32 %v1666, 2147483648
    %v1668 = vmul.f32 %v1667, 1.442695
    %v1669 = vpow.pop %v1668
    %v1670 = vadd.f32 %v1669, 1.0
    %v1671 = vrcp.pop %v1670
    %v1672 = vmul.f32 1.0, %v1671
    %v1673 = vadd.f32 %v1654, %v362
    %v1674 = vmul.f32 %v1665, %v1673
    %v1675 = vadd.f32 %v1572, %v1674
    %v1676 = vtanh.pop %v1675
    %v1677 = vsub.f32 1.0, %v1672
    %v1678 = vmul.f32 %v1677, %v1676
    %v1679 = vmul.f32 %v1672, %v1493
    %v1680 = vadd.f32 %v1678, %v1679
    %1681 = vst [vmem:[#allocation8] sm:$0xff] %v1680
    // Predicated region
    $region22: #{tpu_custom_call.1} parent=1 // pred_check
      _
    $region23: #{tpu_custom_call.1} parent=1 // pred_check_branch
      %1683 = sbr.rel (0) target = $region25
    $region24: #{tpu_custom_call.1} parent=1 // pred_region
      %s1685 = ssub.s32 128, 128
      %1686 = vsyncadd [#allocation7], %s1685
      %s1688 = sshll.u32 [#allocation8], 4
      %s1689 = int_to_ptr.vmem [resolvable:$true] %s1688
      %1691 = dma.vmem_to_hbm [thread:$0]  %s1689, 128, %s5, [#allocation7]
    $region25: #{tpu_custom_call.1} parent=1 // pred_fallthru
      _
    // Predicated region
    $region26: #{tpu_custom_call.1} parent=1 // pred_check
      _
    $region27: #{tpu_custom_call.1} parent=1 // pred_check_branch
      %1693 = sbr.rel (0) target = $region29
    $region28: #{tpu_custom_call.1} parent=1 // pred_region
      %1694 = dma.done [#allocation7], 128
    $region29: #{tpu_custom_call.1} parent=1 // pred_fallthru
      _
    %1695 = vsyncpa [#allocation6], 1
    %1696 = vsyncpa [#allocation7], 1
  %1697 = vsyncmov [#allocation4]
  %s1698 = vpop.sfrf %1697
  %p1699 = scmp.eq.s32.totalorder %s1698, 0
  %p1700 = pneg %p1699
  %1702 = shalt.err (%p1700)
  %s1703 = scalar_lea.sflag [#allocation4], 1
  %1704 = vsyncmov %s1703
  %s1705 = vpop.sfrf %1704
  %p1706 = scmp.eq.s32.totalorder %s1705, 0
  %p1707 = pneg %p1706
  %1709 = shalt.err (%p1707)

</llo_original>
